<compile_context>
chip_gen: v7x
topology: tpu7x:2x2x1
jax: 0.10.0
libtpu: 0.0.40
codegen_flags: <defaults>
</compile_context>

<pallas_src>
import functools

import jax
import jax.numpy as jnp
from jax.experimental import pallas as pl
from jax.experimental.pallas import tpu as pltpu


# ---------------------------------------------------------------------------
# Pallas kernel: fused complex patch matmul, transposed orientation
# ---------------------------------------------------------------------------

def _patch_matmul_kernel(w_ref, x_ref, y_ref):
    # (2P, 2Cin) @ (2Cin, tm) -> (2P, tm): all four real matmuls of the complex
    # product in one MXU call; output store is fully lane dense (tm % 128 == 0).
    y_ref[...] = jnp.dot(w_ref[...], x_ref[...],
                         preferred_element_type=jnp.float32)


# ---------------------------------------------------------------------------
# Tiling heuristics (trace-time, shapes are static)
# ---------------------------------------------------------------------------

def _round_up(x, m):
    return (x + m - 1) // m * m


def _vmem_capacity_bytes():
    """Generation-aware VMEM capacity; conservative fallback = 64 MiB (v7x)."""
    try:
        info_fn = getattr(pltpu, "get_tpu_info", None)
        if info_fn is not None:
            cap = getattr(info_fn(), "vmem_capacity_bytes", None)
            if cap:
                return int(cap)
    except Exception:
        pass
    return 64 * 1024 * 1024


def _choose_tm(M, K, P2, vmem_budget, tm_max=2048):
    """Lane tile over the pixel axis; multiple of 128, >=2 tiles when possible."""
    tm = _round_up(min(max(M, 1), tm_max), 128)
    if M > 128:
        # Keep at least two M tiles so v7x's second TensorCore gets work.
        tm = min(tm, _round_up((M + 1) // 2, 128))

    def step_bytes(t):
        # 2x double-buffered x tile + 2x weight block + 2x double-buffered output.
        return 2 * K * t * 4 + 2 * P2 * K * 4 + 2 * P2 * t * 4

    while tm > 128 and step_bytes(tm) > vmem_budget:
        tm -= 128
    return tm


# ---------------------------------------------------------------------------
# Fused complex patch matmul:  (2P, 2Cin) @ (2Cin, M) -> (2P, M)
# ---------------------------------------------------------------------------

def _fused_patch_matmul(w_block, x_t):
    P2, K = w_block.shape
    Kx, M = x_t.shape
    assert K == Kx

    vmem_cap = _vmem_capacity_bytes()
    budget = (3 * vmem_cap) // 4          # ~96 MiB on v5e/v6e, ~48 MiB on v7x

    tm = _choose_tm(M, K, P2, budget)

    # Pad the pixel (lane) axis only when tm does not divide M (demo: no pad).
    M_pad = _round_up(M, tm)
    if M_pad != M:
        x_t = jnp.pad(x_t, ((0, 0), (0, M_pad - M)))
    n_m = M_pad // tm

    cost = pl.CostEstimate(
        flops=2 * P2 * K * M_pad,
        transcendentals=0,
        bytes_accessed=4 * (K * M_pad + P2 * K + P2 * M_pad),
    )

    y = pl.pallas_call(
        _patch_matmul_kernel,
        out_shape=jax.ShapeDtypeStruct((P2, M_pad), jnp.float32),
        grid_spec=pltpu.PrefetchScalarGridSpec(
            num_scalar_prefetch=0,
            grid=(n_m,),
            in_specs=[
                pl.BlockSpec((P2, K), lambda i: (0, 0)),   # tiny, VMEM-resident
                pl.BlockSpec((K, tm), lambda i: (0, i)),
            ],
            out_specs=pl.BlockSpec((P2, tm), lambda i: (0, i)),
        ),
        compiler_params=pltpu.CompilerParams(
            dimension_semantics=("parallel",),
            vmem_limit_bytes=int(budget)),
        cost_estimate=cost,
    )(w_block, x_t)

    return y[:, :M] if M_pad != M else y


# ---------------------------------------------------------------------------
# col2im via output-phase decomposition: dense pad+add slabs, no strided scatter
# ---------------------------------------------------------------------------

def _col2im_phases(p, N, H, W, Cout, kH, kW, stride, Hout, Wout):
    """p: (2, kH, kW, Cout, N, H, W).  Returns (2, Cout, N, Hout, Wout) f32."""
    s = stride
    Hq = -(-Hout // s)                    # ceil(Hout / s)
    Wq = -(-Wout // s)
    zero = jnp.zeros((2, Cout, N, Hq, Wq), jnp.float32)

    rows = []
    for ph in range(s):
        row = []
        for pw in range(s):
            acc = zero
            for kh in range(ph, kH, s):
                jh = (kh - ph) // s
                for kw in range(pw, kW, s):
                    jw = (kw - pw) // s
                    acc = acc + jnp.pad(
                        p[:, kh, kw],
                        ((0, 0), (0, 0), (0, 0),
                         (jh, Hq - H - jh), (jw, Wq - W - jw)))
            row.append(acc)
        rows.append(jnp.stack(row, axis=-1))       # (2,C,N,Hq,Wq,s): [...,q,r,pw]
    full = jnp.stack(rows, axis=-3)                # (2,C,N,Hq,s,Wq,s): [...,q,ph,r,pw]
    full = full.reshape(2, Cout, N, Hq * s, Wq * s)  # oh = q*s+ph, ow = r*s+pw
    return full[:, :, :, :Hout, :Wout]


# ---------------------------------------------------------------------------
# Public entry point
# ---------------------------------------------------------------------------

@functools.partial(jax.jit, static_argnames=("stride",))
def complex_conv_transpose2d(x, wr, wi, br, bi, *, stride):
    """x: complex64 (N, Cin, H, W); wr/wi: (Cin, Cout, kH, kW); br/bi: (Cout,)."""
    N, Cin, H, W = x.shape
    _, Cout, kH, kW = wr.shape
    Hout = (H - 1) * stride + kH
    Wout = (W - 1) * stride + kW
    P = kH * kW * Cout
    M = N * H * W

    xr = jnp.real(x).astype(jnp.float32)
    xi = jnp.imag(x).astype(jnp.float32)

    # x^T: (2*Cin, N*H*W) -- channels on the sublane axis, pixels on the lane axis.
    x_cat = jnp.concatenate([xr, xi], axis=1)                  # (N, 2Cin, H, W)
    x_t = jnp.transpose(x_cat, (1, 0, 2, 3)).reshape(2 * Cin, M)

    # Weights (Cin, Cout, kH, kW) -> (kH, kW, Cout, Cin) -> (P, Cin): patch rows
    # in (kh, kw, co) order, channel columns.
    wr_m = jnp.transpose(wr.astype(jnp.float32), (2, 3, 1, 0)).reshape(P, Cin)
    wi_m = jnp.transpose(wi.astype(jnp.float32), (2, 3, 1, 0)).reshape(P, Cin)

    # Block weight realizing the complex product in a single real matmul:
    #   y^T = [[wr^T, -wi^T], [wi^T, wr^T]] @ [xr^T ; xi^T]
    #   rows 0..P-1  -> yr patches,  rows P..2P-1 -> yi patches.
    w_block = jnp.concatenate(
        [jnp.concatenate([wr_m, -wi_m], axis=1),
         jnp.concatenate([wi_m,  wr_m], axis=1)],
        axis=0,
    )  # (2P, 2Cin)

    y = _fused_patch_matmul(w_block, x_t)                      # (2P, M), f32
    p = y.reshape(2, kH, kW, Cout, N, H, W)                    # contiguous split

    out = _col2im_phases(p, N, H, W, Cout, kH, kW, stride, Hout, Wout)

    # Biases of the two real ConvTranspose2d modules combine as (br - bi, br + bi).
    bias = jnp.stack([br - bi, br + bi]).astype(jnp.float32)   # (2, Cout)
    out = out + bias[:, :, None, None, None]

    out = jnp.transpose(out, (0, 2, 1, 3, 4))                  # -> (2, N, Cout, Ho, Wo)
    return jax.lax.complex(out[0], out[1])


# ---------------------------------------------------------------------------
# Pure-JAX reference for validation
# ---------------------------------------------------------------------------

def _reference(x, wr, wi, br, bi, stride):
    N, Cin, H, W = x.shape
    _, Cout, kH, kW = wr.shape
    Hout = (H - 1) * stride + kH
    Wout = (W - 1) * stride + kW
    xr = jnp.real(x).astype(jnp.float32)
    xi = jnp.imag(x).astype(jnp.float32)

    def convT(inp, w):
        contrib = jnp.einsum("nchw,cokl->nohwkl", inp, w)
        out = jnp.zeros((N, Cout, Hout, Wout), jnp.float32)
        for kh in range(kH):
            for kw in range(kW):
                out = out.at[
                    :, :,
                    kh: kh + (H - 1) * stride + 1: stride,
                    kw: kw + (W - 1) * stride + 1: stride,
                ].add(contrib[:, :, :, :, kh, kw])
        return out

    yr = convT(xr, wr) - convT(xi, wi) + (br - bi).reshape(1, Cout, 1, 1)
    yi = convT(xr, wi) + convT(xi, wr) + (br + bi).reshape(1, Cout, 1, 1)
    return jax.lax.complex(yr, yi)


if __name__ == "__main__":
    # Small, deterministic configuration.
    N, Cin, Cout = 2, 4, 4
    H = W = 16
    kernel_size, stride = 3, 2

    key = jax.random.PRNGKey(0)
    k_xr, k_xi, k_wr, k_wi, k_br, k_bi = jax.random.split(key, 6)

    xr = jax.random.normal(k_xr, (N, Cin, H, W), jnp.float32)
    xi = jax.random.normal(k_xi, (N, Cin, H, W), jnp.float32)
    x = jax.lax.complex(xr, xi)  # complex64, NCHW

    scale = 1.0 / (Cin * kernel_size * kernel_size) ** 0.5
    wr = scale * jax.random.normal(k_wr, (Cin, Cout, kernel_size, kernel_size), jnp.float32)
    wi = scale * jax.random.normal(k_wi, (Cin, Cout, kernel_size, kernel_size), jnp.float32)
    br = scale * jax.random.normal(k_br, (Cout,), jnp.float32)
    bi = scale * jax.random.normal(k_bi, (Cout,), jnp.float32)

    out = complex_conv_transpose2d(x, wr, wi, br, bi, stride=stride)
    out = jax.block_until_ready(out)

    ref = _reference(x, wr, wi, br, bi, stride)
    assert out.shape == (N, Cout, (H - 1) * stride + kernel_size,
                         (W - 1) * stride + kernel_size)
    assert out.dtype == jnp.complex64
    assert jnp.allclose(out, ref, atol=1e-4, rtol=1e-4)

    print("KERNEL_OK")
</pallas_src>

<mosaic_0001>
module attributes {stable_mosaic.version = 11 : i64} {
  func.func @_patch_matmul_kernel(%arg0: i32, %arg1: memref<72x8xf32, #tpu.memory_space<vmem>>, %arg2: memref<8x256xf32, #tpu.memory_space<vmem>>, %arg3: memref<72x256xf32, #tpu.memory_space<vmem>>) attributes {dimension_semantics = [#tpu.dimension_semantics<parallel>], iteration_bounds = array<i64: 2>, scalar_prefetch = 0 : i64, scratch_operands = 0 : i64, tpu.core_type = #tpu.core_type<tc>, window_params = [{pipeline_mode = #tpu.pipeline_mode<synchronous>, transform_indices = @transform_0, window_bounds = array<i64: 72, 8>}, {transform_indices = @transform_1, window_bounds = array<i64: 8, 256>}, {transform_indices = @transform_2, window_bounds = array<i64: 72, 256>}]} {
    %c0 = arith.constant 0 : index
    %c0_0 = arith.constant 0 : index
    %0 = vector.load %arg1[%c0, %c0_0] : memref<72x8xf32, #tpu.memory_space<vmem>>, vector<72x8xf32>
    %c0_1 = arith.constant 0 : index
    %c0_2 = arith.constant 0 : index
    %1 = vector.load %arg2[%c0_1, %c0_2] : memref<8x256xf32, #tpu.memory_space<vmem>>, vector<8x256xf32>
    %cst = arith.constant dense<0.000000e+00> : vector<72x256xf32>
    %2 = tpu.matmul %0, %1, %cst {dimension_numbers = #tpu.dot_dimension_numbers<[1], [0], [0], [1], [0, 0, 1, 1], [], []>} : vector<72x8xf32>, vector<8x256xf32>, vector<72x256xf32> -> vector<72x256xf32>
    %c0_3 = arith.constant 0 : index
    %c0_4 = arith.constant 0 : index
    %3 = vector.load %arg3[%c0_3, %c0_4] : memref<72x256xf32, #tpu.memory_space<vmem>>, vector<72x256xf32>
    tpu.vector_store %arg3[%c0_3, %c0_4], %2 {strides = array<i32>} : memref<72x256xf32, #tpu.memory_space<vmem>>, vector<72x256xf32>,
    return
  }
  func.func @transform_0(%arg0: i32) -> (i32, i32) {
    %c0_i32 = arith.constant 0 : i32
    %c0_i32_0 = arith.constant 0 : i32
    %c0_i32_1 = arith.constant 0 : i32
    return %c0_i32, %c0_i32_0 : i32, i32
  }
  func.func @transform_1(%arg0: i32) -> (i32, i32) {
    %c0_i32 = arith.constant 0 : i32
    %c0_i32_0 = arith.constant 0 : i32
    return %c0_i32, %arg0 : i32, i32
  }
  func.func @transform_2(%arg0: i32) -> (i32, i32) {
    %c0_i32 = arith.constant 0 : i32
    %c0_i32_0 = arith.constant 0 : i32
    return %c0_i32, %arg0 : i32, i32
  }
}

</mosaic_0001>

<llo_original>
// kernel: neg.1
$region0: #{neg.1}
  #allocation0 [shape = 's32[1]{0}', space=sflag, size = 0x4, scoped, tag = 'scoped memory for neg.1']
  %s0 = inlined_call_operand.vmem [shape: f32[36,4], index: 0, kind: input, shape index: {}]
  %s1 = inlined_call_operand.vmem [shape: f32[36,4], index: 1, kind: output, shape index: {}]
  %v2 = vld [vmem:[%s0] sm:$0xf]
  %3 = xla_tuple %v2
  %4 = xla_tuple %3
  %v5 = vxor.u32 %v2, 2147483648
  %6 = xla_tuple %v5
  %7 = vst [vmem:[%s1] sm:$0xf] %v5

// kernel: custom-call.1
$region0: #{custom-call.1}
  %s0 = inlined_call_operand.hbm [shape: c64[2,4,16,16], index: 0, kind: input, shape index: {}]
  %s1 = inlined_call_operand.vmem [shape: f32[2,4,16,16], index: 1, kind: output, shape index: {}]
  %s2 = scalar_lea.hbm %s0, 2048
  $region1: #{custom-call.1} parent=0
    #allocation0 [shape = 's32[1]{0}', space=sflag, size = 0x4, scoped, tag = 'scoped memory for custom-call.1']
    %3 = vsyncpa [#allocation0], 0
    %s4 = sshll.u32 %s1, 4
    %s5 = int_to_ptr.vmem [resolvable:$true] %s4
    %7 = dma.hbm_to_vmem [thread:$0]  %s2, 2048, %s5, [#allocation0]
    %8 = dma.done [#allocation0], 2048
    %9 = vsyncpa [#allocation0], 1

// kernel: custom-call
$region0: #{custom-call}
  %s0 = inlined_call_operand.hbm [shape: c64[2,4,16,16], index: 0, kind: input, shape index: {}]
  %s1 = inlined_call_operand.vmem [shape: f32[2,4,16,16], index: 1, kind: output, shape index: {}]
  $region1: #{custom-call} parent=0
    #allocation0 [shape = 's32[1]{0}', space=sflag, size = 0x4, scoped, tag = 'scoped memory for custom-call']
    %2 = vsyncpa [#allocation0], 0
    %s3 = sshll.u32 %s1, 4
    %s4 = int_to_ptr.vmem [resolvable:$true] %s3
    %6 = dma.hbm_to_vmem [thread:$0]  %s0, 2048, %s4, [#allocation0]
    %7 = dma.done [#allocation0], 2048
    %8 = vsyncpa [#allocation0], 1

// kernel: complex_conv_transpose2d.1
$region0: #{complex_conv_transpose2d.1}
  #allocation0 [shape = 'u32[]', space=smem, size = 0x4, offset = 0x4, fixed_abs, tag = 'smem constant byte address 0x4 - core index']
  #allocation1 [shape = 'u32[144,128]{1,0:T(1,128)}', space=vmem, size = 0x12000, scoped, tag = 'internal scratch']
  %s0 = inlined_call_operand.vmem [shape: f32[72,8], index: 0, kind: input, shape index: {}]
  %s1 = inlined_call_operand.vmem [shape: f32[8,512], index: 1, kind: input, shape index: {}]
  %s2 = inlined_call_operand.vmem [shape: f32[72,512], index: 2, kind: output, shape index: {}]
  %s3 = sld [smem:[#allocation0]]
  $region60: #{complex_conv_transpose2d.1} parent=0
    _
  %s5 = ssub.s32 1, %s3
  %s6 = scalar_select 0, %s5, %s3
  $region1: #{complex_conv_transpose2d.1} parent=0
    #allocation2 [shape = 'u8[147456]{0}', space=vmem, size = 0x24000, scoped, tag = 'output window, operand 0']
    loop: start=0, step=1, limit=4
    $region2: #{complex_conv_transpose2d.1} parent=1 // loop_pre_header
      _
    $region3: #{complex_conv_transpose2d.1} parent=1 // loop_header
      %s8 = sphi 0, %s12
      %p9 = scmp.ge.s32.totalorder %s8, 4
      %s16 = sphi 0, %s16
      %s18 = sphi 0, %s16
      %s19 = sphi 0, %s18
      %s33 = sphi 0, %s19
      %s39 = sphi 0, %s41
      %s42 = sphi 0, %s39
      %s43 = sphi 0, %s42
      %s59 = sphi 0, %s43
      %s65 = sphi 0, %s67
      %s68 = sphi 0, %s65
      %s69 = sphi 0, %s68
      %s85 = sphi 0, %s69
    $region4: #{complex_conv_transpose2d.1} parent=1 // loop_header_branch
      %11 = sbr.rel (%p9) target = $region8
    $region5: #{complex_conv_transpose2d.1} parent=1 // loop_body
      %s13 = ssub.s32 %s8, 1
      %s14 = ssub.s32 %s8, 2
      %s15 = sadd.s32 %s8, 1
      %s17 = sadd.s32 %s16, 1
      %p20 = scmp.eq.s32.totalorder %s8, 1
      %p21 = scmp.ne.s32.totalorder %s16, %s18
      %p22 = scmp.eq.s32.totalorder %s8, 0
      %p23 = por %p21, %p22
      %p24 = scmp.ne.s32.totalorder %s16, %s18
      %p25 = scmp.eq.s32.totalorder %s13, 1
      %p26 = por %p24, %p25
      %p27 = scmp.ne.s32.totalorder %s18, %s19
      %p28 = scmp.eq.s32.totalorder %s13, 0
      %p29 = por %p27, %p28
      %p30 = scmp.ne.s32.totalorder %s18, %s19
      %p31 = scmp.eq.s32.totalorder %s14, 1
      %p32 = por %p30, %p31
      %p34 = scmp.ne.s32.totalorder %s19, %s33
      %p35 = scmp.eq.s32.totalorder %s14, 0
      %p36 = por %p34, %p35
      %s37 = ssub.s32 %s8, %s15
      %p38 = scmp.eq.s32.totalorder %s37, 0
      %s40 = sadd.s32 %s39, 1
      %s41 = scalar_select %p38, %s39, %s40
      %p44 = pneg %p38
      %p45 = scmp.eq.s32.totalorder %s8, 1
      %p46 = por %p44, %p45
      %p47 = scmp.ne.s32.totalorder %s39, %s42
      %p48 = scmp.eq.s32.totalorder %s8, 0
      %p49 = por %p47, %p48
      %p50 = scmp.ne.s32.totalorder %s39, %s42
      %p51 = scmp.eq.s32.totalorder %s13, 1
      %p52 = por %p50, %p51
      %p53 = scmp.ne.s32.totalorder %s42, %s43
      %p54 = scmp.eq.s32.totalorder %s13, 0
      %p55 = por %p53, %p54
      %p56 = scmp.ne.s32.totalorder %s42, %s43
      %p57 = scmp.eq.s32.totalorder %s14, 1
      %p58 = por %p56, %p57
      %p60 = scmp.ne.s32.totalorder %s43, %s59
      %p61 = scmp.eq.s32.totalorder %s14, 0
      %p62 = por %p60, %p61
      %s63 = ssub.s32 %s8, %s15
      %p64 = scmp.eq.s32.totalorder %s63, 0
      %s66 = sadd.s32 %s65, 1
      %s67 = scalar_select %p64, %s65, %s66
      %p70 = pneg %p64
      %p71 = scmp.eq.s32.totalorder %s8, 1
      %p72 = por %p70, %p71
      %p73 = scmp.ne.s32.totalorder %s65, %s68
      %p74 = scmp.eq.s32.totalorder %s8, 0
      %p75 = por %p73, %p74
      %p76 = scmp.ne.s32.totalorder %s65, %s68
      %p77 = scmp.eq.s32.totalorder %s13, 1
      %p78 = por %p76, %p77
      %p79 = scmp.ne.s32.totalorder %s68, %s69
      %p80 = scmp.eq.s32.totalorder %s13, 0
      %p81 = por %p79, %p80
      %p82 = scmp.ne.s32.totalorder %s68, %s69
      %p83 = scmp.eq.s32.totalorder %s14, 1
      %p84 = por %p82, %p83
      %p86 = scmp.ne.s32.totalorder %s69, %s85
      %p87 = scmp.eq.s32.totalorder %s14, 0
      %p88 = por %p86, %p87
      %p89 = scmp.le.s32.totalorder 1, %s8
      %p90 = scmp.lt.s32.totalorder %s8, 3
      %p91 = pnand %p89, %p90
      %p92 = pneg %p91
      // Predicated region
      $region9: #{complex_conv_transpose2d.1} parent=5 // pred_check
        _
      $region10: #{complex_conv_transpose2d.1} parent=5 // pred_check_branch
        %94 = sbr.rel (%p91) target = $region12
      $region11: #{complex_conv_transpose2d.1} parent=5 // pred_region
        %s95 = ssub.s32 %s8, 1
        // Predicated region
        $region13: #{complex_conv_transpose2d.1} parent=11 // pred_check
          %p96 = pneg %p29
        $region14: #{complex_conv_transpose2d.1} parent=11 // pred_check_branch
          %98 = sbr.rel (%p96) target = $region16
        $region15: #{complex_conv_transpose2d.1} parent=11 // pred_region
          _
        $region16: #{complex_conv_transpose2d.1} parent=11 // pred_fallthru
          _
      $region12: #{complex_conv_transpose2d.1} parent=5 // pred_fallthru
        _
      %p99 = scmp.lt.s32.totalorder %s8, 2
      // Predicated region
      $region17: #{complex_conv_transpose2d.1} parent=5 // pred_check
        %p100 = pneg %p99
      $region18: #{complex_conv_transpose2d.1} parent=5 // pred_check_branch
        %102 = sbr.rel (%p100) target = $region20
      $region19: #{complex_conv_transpose2d.1} parent=5 // pred_region
        // Predicated region
        $region21: #{complex_conv_transpose2d.1} parent=19 // pred_check
          %p103 = pneg %p49
        $region22: #{complex_conv_transpose2d.1} parent=19 // pred_check_branch
          %105 = sbr.rel (%p103) target = $region24
        $region23: #{complex_conv_transpose2d.1} parent=19 // pred_region
          %s106 = smul.u32 2, %s8
          %p107 = scmp.lt.s32.totalorder %s106, 3
          %s108 = scalar_select %p107, %s106, 3
          %s109 = smul.addr %s108, 8
          %s110 = scalar_lea.vmem %s1, %s109
          %s111 = smul.u32 2, %s8
        $region24: #{complex_conv_transpose2d.1} parent=19 // pred_fallthru
          _
      $region20: #{complex_conv_transpose2d.1} parent=5 // pred_fallthru
        _
      %p112 = scmp.le.s32.totalorder 1, %s8
      %p113 = scmp.lt.s32.totalorder %s8, 3
      %p114 = pnand %p112, %p113
      %p115 = pneg %p114
      // Predicated region
      $region25: #{complex_conv_transpose2d.1} parent=5 // pred_check
        _
      $region26: #{complex_conv_transpose2d.1} parent=5 // pred_check_branch
        %117 = sbr.rel (%p114) target = $region28
      $region27: #{complex_conv_transpose2d.1} parent=5 // pred_region
        %s118 = ssub.s32 %s8, 1
        %p119 = pneg %p29
        %p120 = pneg %p26
        %s121 = smul.u32 2, %s13
        %p122 = scmp.lt.s32.totalorder %s121, 3
        %s123 = scalar_select %p122, %s121, 3
        %s124 = smul.addr %s123, 8
        %s125 = scalar_lea.vmem %s1, %s124
        %p126 = pneg %p55
        %p127 = pneg %p52
        %p128 = pneg %p81
        %p129 = pneg %p78
        %s130 = sand.u32 %s68, 1
        %s131 = sand.u32 %s68, 1
        %s132 = smul.addr %s131, 144
        %s133 = scalar_lea.vmem [#allocation2], %s132
        %s134 = smul.u32 2, %s13
        %p135 = scmp.lt.s32.totalorder %s134, 3
        %s136 = scalar_select %p135, %s134, 3
        %s137 = smul.addr %s136, 8
        %s138 = scalar_lea.vmem %s1, %s137
        %s139 = smul.u32 2, %s13
        %s140 = smul.u32 2, %s13
        %v141 = vld [vmem:[%s0] sm:$0xff]
        %v142 = vld [vmem:[%s0 + $0x8] sm:$0xff]
        %v143 = vld [vmem:[%s0 + $0x10] sm:$0xff]
        %v144 = vld [vmem:[%s0 + $0x18] sm:$0xff]
        %v145 = vld [vmem:[%s0 + $0x20] sm:$0xff]
        %v146 = vld [vmem:[%s0 + $0x28] sm:$0xff]
        %v147 = vld [vmem:[%s0 + $0x30] sm:$0xff]
        %v148 = vld [vmem:[%s0 + $0x38] sm:$0xff]
        %v149 = vld [vmem:[%s0 + $0x40] sm:$0xff]
        %v150 = vld [vmem:[%s138] sm:$0xff]
        %v151 = vld [vmem:[%s138 + $0x8] sm:$0xff]
        %vm152 = vcmask 64512
        %v154 = vsel %vm152, %v141, 0
        %v157 = vsel %vm152, %v142, 0
        %v160 = vsel %vm152, %v143, 0
        %v163 = vsel %vm152, %v144, 0
        %v166 = vsel %vm152, %v145, 0
        %v169 = vsel %vm152, %v146, 0
        %v172 = vsel %vm152, %v147, 0
        %v175 = vsel %vm152, %v148, 0
        %v178 = vsel %vm152, %v149, 0
        %180 = vmatprep.subr.mxu0 %v151
        %181 = vmatpush1.msra.mxu0 %v150
        %182 = vmatprep.subr.mxu0 0.0
        %183 = vmatpush1.msra.mxu0 0.0
        %184 = vmatprep.subr.mxu0 0.0
        %185 = vmatpush1.msra.mxu0 0.0
        %186 = vmatprep.subr.mxu0 0.0
        %187 = vmatpush1.msra.mxu0 0.0
        %188 = vmatprep.subr.mxu0 0.0
        %189 = vmatpush1.msra.mxu0 0.0
        %190 = vmatprep.subr.mxu0 0.0
        %191 = vmatpush1.msra.mxu0 0.0
        %192 = vmatprep.subr.mxu0 0.0
        %193 = vmatpush1.msra.mxu0 0.0
        %194 = vmatprep.subr.mxu0 0.0
        %195 = vmatpush1.msra.mxu0 0.0
        %196 = vmatprep.subr.mxu0 0.0
        %197 = vmatpush1.msra.mxu0 0.0
        %198 = vmatprep.subr.mxu0 0.0
        %199 = vmatpush1.msra.mxu0 0.0
        %200 = vmatprep.subr.mxu0 0.0
        %201 = vmatpush1.msra.mxu0 0.0
        %202 = vmatprep.subr.mxu0 0.0
        %203 = vmatpush1.msra.mxu0 0.0
        %204 = vmatprep.subr.mxu0 0.0
        %205 = vmatpush1.msra.mxu0 0.0
        %206 = vmatprep.subr.mxu0 0.0
        %207 = vmatpush1.msra.mxu0 0.0
        %208 = vmatprep.subr.mxu0 0.0
        %209 = vmatpush1.msra.mxu0 0.0
        %210 = vmatprep.subr.mxu0 0.0
        %211 = vmatpush1.msra.mxu0 0.0
        %212 = vmatprep.subr.mxu0 0.0
        %213 = vmatpush1.msra.mxu0 0.0
        %214 = vmatprep.subr.mxu0 0.0
        %215 = vmatpush1.msra.mxu0 0.0
        %216 = vmatprep.subr.mxu0 0.0
        %217 = vmatpush1.msra.mxu0 0.0
        %218 = vmatprep.subr.mxu0 0.0
        %219 = vmatpush1.msra.mxu0 0.0
        %220 = vmatprep.subr.mxu0 0.0
        %221 = vmatpush1.msra.mxu0 0.0
        %222 = vmatprep.subr.mxu0 0.0
        %223 = vmatpush1.msra.mxu0 0.0
        %224 = vmatprep.subr.mxu0 0.0
        %225 = vmatpush1.msra.mxu0 0.0
        %226 = vmatprep.subr.mxu0 0.0
        %227 = vmatpush1.msra.mxu0 0.0
        %228 = vmatprep.subr.mxu0 0.0
        %229 = vmatpush1.msra.mxu0 0.0
        %230 = vmatprep.subr.mxu0 0.0
        %231 = vmatpush1.msra.mxu0 0.0
        %232 = vmatprep.subr.mxu0 0.0
        %233 = vmatpush1.msra.mxu0 0.0
        %234 = vmatprep.subr.mxu0 0.0
        %235 = vmatpush1.msra.mxu0 0.0
        %236 = vmatprep.subr.mxu0 0.0
        %237 = vmatpush1.msra.mxu0 0.0
        %238 = vmatprep.subr.mxu0 0.0
        %239 = vmatpush1.msra.mxu0 0.0
        %240 = vmatprep.subr.mxu0 0.0
        %241 = vmatpush1.msra.mxu0 0.0
        %242 = vmatprep.subr.mxu0 0.0
        %243 = vmatpush1.msra.mxu0 0.0
        %244 = vmatprep.mubr.f32.mxu0 0.0
        %245 = vmatmul.mubr.f32.gmra.mrb[0].mxu0 %v154
        %v246 = vpop.f32.mrb[0].mxu0
        %v247 = vadd.f32 0.0, %v246
        %v248 = vpop.f32.mrb[0].mxu0
        %v249 = vadd.f32 0.0, %v248
        %250 = vmatprep.mubr.f32.mxu0 0.0
        %251 = vmatmul.mubr.f32.gmra.mrb[0].mxu0 %v157
        %v252 = vpop.f32.mrb[0].mxu0
        %v253 = vadd.f32 0.0, %v252
        %v254 = vpop.f32.mrb[0].mxu0
        %v255 = vadd.f32 0.0, %v254
        %256 = vmatprep.mubr.f32.mxu0 0.0
        %257 = vmatmul.mubr.f32.gmra.mrb[0].mxu0 %v160
        %v258 = vpop.f32.mrb[0].mxu0
        %v259 = vadd.f32 0.0, %v258
        %v260 = vpop.f32.mrb[0].mxu0
        %v261 = vadd.f32 0.0, %v260
        %262 = vmatprep.mubr.f32.mxu0 0.0
        %263 = vmatmul.mubr.f32.gmra.mrb[0].mxu0 %v163
        %v264 = vpop.f32.mrb[0].mxu0
        %v265 = vadd.f32 0.0, %v264
        %v266 = vpop.f32.mrb[0].mxu0
        %v267 = vadd.f32 0.0, %v266
        %268 = vmatprep.mubr.f32.mxu0 0.0
        %269 = vmatmul.mubr.f32.gmra.mrb[0].mxu0 %v166
        %v270 = vpop.f32.mrb[0].mxu0
        %v271 = vadd.f32 0.0, %v270
        %v272 = vpop.f32.mrb[0].mxu0
        %v273 = vadd.f32 0.0, %v272
        %274 = vmatprep.mubr.f32.mxu0 0.0
        %275 = vmatmul.mubr.f32.gmra.mrb[0].mxu0 %v169
        %v276 = vpop.f32.mrb[0].mxu0
        %v277 = vadd.f32 0.0, %v276
        %v278 = vpop.f32.mrb[0].mxu0
        %v279 = vadd.f32 0.0, %v278
        %280 = vmatprep.mubr.f32.mxu0 0.0
        %281 = vmatmul.mubr.f32.gmra.mrb[0].mxu0 %v172
        %v282 = vpop.f32.mrb[0].mxu0
        %v283 = vadd.f32 0.0, %v282
        %v284 = vpop.f32.mrb[0].mxu0
        %v285 = vadd.f32 0.0, %v284
        %286 = vmatprep.mubr.f32.mxu0 0.0
        %287 = vmatmul.mubr.f32.gmra.mrb[0].mxu0 %v175
        %v288 = vpop.f32.mrb[0].mxu0
        %v289 = vadd.f32 0.0, %v288
        %v290 = vpop.f32.mrb[0].mxu0
        %v291 = vadd.f32 0.0, %v290
        %292 = vmatprep.mubr.f32.mxu0 0.0
        %293 = vmatmul.mubr.f32.gmra.mrb[0].mxu0 %v178
        %v294 = vpop.f32.mrb[0].mxu0
        %v295 = vadd.f32 0.0, %v294
        %v296 = vpop.f32.mrb[0].mxu0
        %v297 = vadd.f32 0.0, %v296
        %298 = vdwg.mxu0
        %299 = vst [vmem:[%s133] sm:$0xff] %v247
        %300 = vst [vmem:[%s133 + $0x8] sm:$0xff] %v249
        %301 = vst [vmem:[%s133 + $0x10] sm:$0xff] %v253
        %302 = vst [vmem:[%s133 + $0x18] sm:$0xff] %v255
        %303 = vst [vmem:[%s133 + $0x20] sm:$0xff] %v259
        %304 = vst [vmem:[%s133 + $0x28] sm:$0xff] %v261
        %305 = vst [vmem:[%s133 + $0x30] sm:$0xff] %v265
        %306 = vst [vmem:[%s133 + $0x38] sm:$0xff] %v267
        %307 = vst [vmem:[%s133 + $0x40] sm:$0xff] %v271
        %308 = vst [vmem:[%s133 + $0x48] sm:$0xff] %v273
        %309 = vst [vmem:[%s133 + $0x50] sm:$0xff] %v277
        %310 = vst [vmem:[%s133 + $0x58] sm:$0xff] %v279
        %311 = vst [vmem:[%s133 + $0x60] sm:$0xff] %v283
        %312 = vst [vmem:[%s133 + $0x68] sm:$0xff] %v285
        %313 = vst [vmem:[%s133 + $0x70] sm:$0xff] %v289
        %314 = vst [vmem:[%s133 + $0x78] sm:$0xff] %v291
        %315 = vst [vmem:[%s133 + $0x80] sm:$0xff] %v295
        %316 = vst [vmem:[%s133 + $0x88] sm:$0xff] %v297
        %s317 = sand.u32 %s68, 1
        %s318 = sand.u32 %s68, 1
        %s319 = smul.addr %s318, 144
        %s320 = scalar_lea.vmem [#allocation2], %s319
        // Predicated region
        $region29: #{complex_conv_transpose2d.1} parent=27 // pred_check
          %p321 = pneg %p78
        $region30: #{complex_conv_transpose2d.1} parent=27 // pred_check_branch
          %323 = sbr.rel (%p321) target = $region32
        $region31: #{complex_conv_transpose2d.1} parent=27 // pred_region
          %s324 = smul.u32 2, %s13
          %s325 = smul.addr %s324, 8
          %s326 = scalar_lea.vmem %s2, %s325
          // Predicated region
          $region33: #{complex_conv_transpose2d.1} parent=31 // pred_check
            _
          $region34: #{complex_conv_transpose2d.1} parent=31 // pred_check_branch
            %328 = sbr.rel (0) target = $region36
          $region35: #{complex_conv_transpose2d.1} parent=31 // pred_region
            // Predicated region
            $region37: #{complex_conv_transpose2d.1} parent=35 // pred_check
              _
            $region38: #{complex_conv_transpose2d.1} parent=35 // pred_check_branch
              %330 = sbr.rel (0) target = $region40
            $region39: #{complex_conv_transpose2d.1} parent=35 // pred_region
              loop: start=0, step=1, limit=1
              $region41: #{complex_conv_transpose2d.1} parent=39 // loop_pre_header
                _
              $region42: #{complex_conv_transpose2d.1} parent=39 // loop_header
                %s332 = sphi 0, %s336
                %p333 = scmp.ge.s32.totalorder %s332, 1
                %s337 = sphi %s320, %s320
                %s338 = sphi %s326, %s326
              $region43: #{complex_conv_transpose2d.1} parent=39 // loop_header_branch
                %335 = sbr.rel (%p333) target = $region47
              $region44: #{complex_conv_transpose2d.1} parent=39 // loop_body
                %v339 = vld [vmem:[%s337] sm:$0xff]
                %340 = vst [vmem:[%s338] sm:$0xff] %v339
                %v341 = vld [vmem:[%s337 + $0x8] sm:$0xff]
                %342 = vst [vmem:[%s338 + $0x8] sm:$0xff] %v341
                %v343 = vld [vmem:[%s337 + $0x10] sm:$0xff]
                %344 = vst [vmem:[%s338 + $0x20] sm:$0xff] %v343
                %v345 = vld [vmem:[%s337 + $0x18] sm:$0xff]
                %346 = vst [vmem:[%s338 + $0x28] sm:$0xff] %v345
                %v347 = vld [vmem:[%s337 + $0x20] sm:$0xff]
                %348 = vst [vmem:[%s338 + $0x40] sm:$0xff] %v347
                %v349 = vld [vmem:[%s337 + $0x28] sm:$0xff]
                %350 = vst [vmem:[%s338 + $0x48] sm:$0xff] %v349
                %v351 = vld [vmem:[%s337 + $0x30] sm:$0xff]
                %352 = vst [vmem:[%s338 + $0x60] sm:$0xff] %v351
                %v353 = vld [vmem:[%s337 + $0x38] sm:$0xff]
                %354 = vst [vmem:[%s338 + $0x68] sm:$0xff] %v353
                %v355 = vld [vmem:[%s337 + $0x40] sm:$0xff]
                %356 = vst [vmem:[%s338 + $0x80] sm:$0xff] %v355
                %v357 = vld [vmem:[%s337 + $0x48] sm:$0xff]
                %358 = vst [vmem:[%s338 + $0x88] sm:$0xff] %v357
                %v359 = vld [vmem:[%s337 + $0x50] sm:$0xff]
                %360 = vst [vmem:[%s338 + $0xa0] sm:$0xff] %v359
                %v361 = vld [vmem:[%s337 + $0x58] sm:$0xff]
                %362 = vst [vmem:[%s338 + $0xa8] sm:$0xff] %v361
                %v363 = vld [vmem:[%s337 + $0x60] sm:$0xff]
                %364 = vst [vmem:[%s338 + $0xc0] sm:$0xff] %v363
                %v365 = vld [vmem:[%s337 + $0x68] sm:$0xff]
                %366 = vst [vmem:[%s338 + $0xc8] sm:$0xff] %v365
                %v367 = vld [vmem:[%s337 + $0x70] sm:$0xff]
                %368 = vst [vmem:[%s338 + $0xe0] sm:$0xff] %v367
                %v369 = vld [vmem:[%s337 + $0x78] sm:$0xff]
                %370 = vst [vmem:[%s338 + $0xe8] sm:$0xff] %v369
                %v371 = vld [vmem:[%s337 + $0x80] sm:$0xff]
                %372 = vst [vmem:[%s338 + $0x100] sm:$0xff] %v371
                %v373 = vld [vmem:[%s337 + $0x88] sm:$0xff]
                %374 = vst [vmem:[%s338 + $0x108] sm:$0xff] %v373
              $region45: #{complex_conv_transpose2d.1} parent=39 // loop_footer
                %s336 = sadd.s32 1, %s332
              $region46: #{complex_conv_transpose2d.1} parent=39 // loop_footer_branch
                %331 = sbr.rel target = $region42
              $region47: #{complex_conv_transpose2d.1} parent=39 // loop_exit
                _
            $region40: #{complex_conv_transpose2d.1} parent=35 // pred_fallthru
              _
            // Predicated region
            $region48: #{complex_conv_transpose2d.1} parent=35 // pred_check
              _
            $region49: #{complex_conv_transpose2d.1} parent=35 // pred_check_branch
              %376 = sbr.rel target = $region51
            $region50: #{complex_conv_transpose2d.1} parent=35 // pred_region
              _
            $region51: #{complex_conv_transpose2d.1} parent=35 // pred_fallthru
              _
          $region36: #{complex_conv_transpose2d.1} parent=31 // pred_fallthru
            _
          %377 = vnop
        $region32: #{complex_conv_transpose2d.1} parent=27 // pred_fallthru
          _
      $region28: #{complex_conv_transpose2d.1} parent=5 // pred_fallthru
        _
      %p378 = scmp.le.s32.totalorder 2, %s8
      // Predicated region
      $region52: #{complex_conv_transpose2d.1} parent=5 // pred_check
        %p379 = pneg %p378
      $region53: #{complex_conv_transpose2d.1} parent=5 // pred_check_branch
        %381 = sbr.rel (%p379) target = $region55
      $region54: #{complex_conv_transpose2d.1} parent=5 // pred_region
        %s382 = ssub.s32 %s8, 2
        // Predicated region
        $region56: #{complex_conv_transpose2d.1} parent=54 // pred_check
          %p383 = pneg %p84
        $region57: #{complex_conv_transpose2d.1} parent=54 // pred_check_branch
          %385 = sbr.rel (%p383) target = $region59
        $region58: #{complex_conv_transpose2d.1} parent=54 // pred_region
          %s386 = sand.u32 %s69, 1
          %s387 = sand.u32 %s69, 1
          %s388 = smul.addr %s387, 144
          %s389 = scalar_lea.vmem [#allocation2], %s388
        $region59: #{complex_conv_transpose2d.1} parent=54 // pred_fallthru
          _
      $region55: #{complex_conv_transpose2d.1} parent=5 // pred_fallthru
        _
    $region6: #{complex_conv_transpose2d.1} parent=1 // loop_footer
      %s12 = sadd.s32 1, %s8
    $region7: #{complex_conv_transpose2d.1} parent=1 // loop_footer_branch
      %7 = sbr.rel target = $region3
    $region8: #{complex_conv_transpose2d.1} parent=1 // loop_exit
      _

// kernel: custom-call.2
$region0: #{custom-call.2}
  %s0 = inlined_call_operand.vmem [shape: f32[2,4,33,33], index: 0, kind: input, shape index: {}]
  %s1 = inlined_call_operand.vmem [shape: f32[2,4,33,33], index: 1, kind: input, shape index: {}]
  %s2 = inlined_call_operand.vmem [shape: c64[2,4,33,33], index: 2, kind: output, shape index: {}]
  %s4 = scalar_lea.vmem %s2, 2178
  %v5 = vld [vmem:[%s0] sm:$0xff]
  %6 = vst [vmem:[%s2] sm:$0xff] %v5
  %s7 = scalar_lea.vmem %s2, 8
  %s8 = scalar_lea.vmem %s0, 8
  %v9 = vld [vmem:[%s8] sm:$0xff]
  %10 = vst [vmem:[%s7] sm:$0xff] %v9
  %s11 = scalar_lea.vmem %s2, 16
  %s12 = scalar_lea.vmem %s0, 16
  %v13 = vld [vmem:[%s12] sm:$0xff]
  %14 = vst [vmem:[%s11] sm:$0xff] %v13
  %s15 = scalar_lea.vmem %s2, 24
  %s16 = scalar_lea.vmem %s0, 24
  %v17 = vld [vmem:[%s16] sm:$0xff]
  %18 = vst [vmem:[%s15] sm:$0xff] %v17
  %s19 = scalar_lea.vmem %s2, 32
  %s20 = scalar_lea.vmem %s0, 32
  %v21 = vld [vmem:[%s20] sm:$0xff]
  %22 = vst [vmem:[%s19] sm:$0xff] %v21
  %s23 = scalar_lea.vmem %s2, 40
  %s24 = scalar_lea.vmem %s0, 40
  %v25 = vld [vmem:[%s24] sm:$0xff]
  %26 = vst [vmem:[%s23] sm:$0xff] %v25
  %s27 = scalar_lea.vmem %s2, 48
  %s28 = scalar_lea.vmem %s0, 48
  %v29 = vld [vmem:[%s28] sm:$0xff]
  %30 = vst [vmem:[%s27] sm:$0xff] %v29
  %s31 = scalar_lea.vmem %s2, 56
  %s32 = scalar_lea.vmem %s0, 56
  %v33 = vld [vmem:[%s32] sm:$0xff]
  %34 = vst [vmem:[%s31] sm:$0xff] %v33
  %s35 = scalar_lea.vmem %s2, 64
  %s36 = scalar_lea.vmem %s0, 64
  %v37 = vld [vmem:[%s36] sm:$0xff]
  %38 = vst [vmem:[%s35] sm:$0xff] %v37
  %s39 = scalar_lea.vmem %s2, 72
  %s40 = scalar_lea.vmem %s0, 72
  %v41 = vld [vmem:[%s40] sm:$0xff]
  %42 = vst [vmem:[%s39] sm:$0xff] %v41
  %s43 = scalar_lea.vmem %s2, 80
  %s44 = scalar_lea.vmem %s0, 80
  %v45 = vld [vmem:[%s44] sm:$0xff]
  %46 = vst [vmem:[%s43] sm:$0xff] %v45
  %s47 = scalar_lea.vmem %s2, 88
  %s48 = scalar_lea.vmem %s0, 88
  %v49 = vld [vmem:[%s48] sm:$0xff]
  %50 = vst [vmem:[%s47] sm:$0xff] %v49
  %s51 = scalar_lea.vmem %s2, 96
  %s52 = scalar_lea.vmem %s0, 96
  %v53 = vld [vmem:[%s52] sm:$0xff]
  %54 = vst [vmem:[%s51] sm:$0xff] %v53
  %s55 = scalar_lea.vmem %s2, 104
  %s56 = scalar_lea.vmem %s0, 104
  %v57 = vld [vmem:[%s56] sm:$0xff]
  %58 = vst [vmem:[%s55] sm:$0xff] %v57
  %s59 = scalar_lea.vmem %s2, 112
  %s60 = scalar_lea.vmem %s0, 112
  %v61 = vld [vmem:[%s60] sm:$0xff]
  %62 = vst [vmem:[%s59] sm:$0xff] %v61
  %s63 = scalar_lea.vmem %s2, 120
  %s64 = scalar_lea.vmem %s0, 120
  %v65 = vld [vmem:[%s64] sm:$0xff]
  %66 = vst [vmem:[%s63] sm:$0xff] %v65
  %s67 = scalar_lea.vmem %s2, 128
  %s68 = scalar_lea.vmem %s0, 128
  %v69 = vld [vmem:[%s68] sm:$0xff]
  %70 = vst [vmem:[%s67] sm:$0xff] %v69
  %s71 = scalar_lea.vmem %s2, 136
  %s72 = scalar_lea.vmem %s0, 136
  %v73 = vld [vmem:[%s72] sm:$0xff]
  %74 = vst [vmem:[%s71] sm:$0xff] %v73
  %s75 = scalar_lea.vmem %s2, 144
  %s76 = scalar_lea.vmem %s0, 144
  %v77 = vld [vmem:[%s76] sm:$0xff]
  %78 = vst [vmem:[%s75] sm:$0xff] %v77
  %s79 = scalar_lea.vmem %s2, 152
  %s80 = scalar_lea.vmem %s0, 152
  %v81 = vld [vmem:[%s80] sm:$0xff]
  %82 = vst [vmem:[%s79] sm:$0xff] %v81
  %s83 = scalar_lea.vmem %s2, 160
  %s84 = scalar_lea.vmem %s0, 160
  %v85 = vld [vmem:[%s84] sm:$0xff]
  %86 = vst [vmem:[%s83] sm:$0xff] %v85
  %s87 = scalar_lea.vmem %s2, 168
  %s88 = scalar_lea.vmem %s0, 168
  %v89 = vld [vmem:[%s88] sm:$0xff]
  %90 = vst [vmem:[%s87] sm:$0xff] %v89
  %s91 = scalar_lea.vmem %s2, 176
  %s92 = scalar_lea.vmem %s0, 176
  %v93 = vld [vmem:[%s92] sm:$0xff]
  %94 = vst [vmem:[%s91] sm:$0xff] %v93
  %s95 = scalar_lea.vmem %s2, 184
  %s96 = scalar_lea.vmem %s0, 184
  %v97 = vld [vmem:[%s96] sm:$0xff]
  %98 = vst [vmem:[%s95] sm:$0xff] %v97
  %s99 = scalar_lea.vmem %s2, 192
  %s100 = scalar_lea.vmem %s0, 192
  %v101 = vld [vmem:[%s100] sm:$0xff]
  %102 = vst [vmem:[%s99] sm:$0xff] %v101
  %s103 = scalar_lea.vmem %s2, 200
  %s104 = scalar_lea.vmem %s0, 200
  %v105 = vld [vmem:[%s104] sm:$0xff]
  %106 = vst [vmem:[%s103] sm:$0xff] %v105
  %s107 = scalar_lea.vmem %s2, 208
  %s108 = scalar_lea.vmem %s0, 208
  %v109 = vld [vmem:[%s108] sm:$0xff]
  %110 = vst [vmem:[%s107] sm:$0xff] %v109
  %s111 = scalar_lea.vmem %s2, 216
  %s112 = scalar_lea.vmem %s0, 216
  %v113 = vld [vmem:[%s112] sm:$0xff]
  %114 = vst [vmem:[%s111] sm:$0xff] %v113
  %s115 = scalar_lea.vmem %s2, 224
  %s116 = scalar_lea.vmem %s0, 224
  %v117 = vld [vmem:[%s116] sm:$0xff]
  %118 = vst [vmem:[%s115] sm:$0xff] %v117
  %s119 = scalar_lea.vmem %s2, 232
  %s120 = scalar_lea.vmem %s0, 232
  %v121 = vld [vmem:[%s120] sm:$0xff]
  %122 = vst [vmem:[%s119] sm:$0xff] %v121
  %s123 = scalar_lea.vmem %s2, 240
  %s124 = scalar_lea.vmem %s0, 240
  %v125 = vld [vmem:[%s124] sm:$0xff]
  %126 = vst [vmem:[%s123] sm:$0xff] %v125
  %s127 = scalar_lea.vmem %s2, 248
  %s128 = scalar_lea.vmem %s0, 248
  %v129 = vld [vmem:[%s128] sm:$0xff]
  %130 = vst [vmem:[%s127] sm:$0xff] %v129
  %s131 = scalar_lea.vmem %s2, 256
  %s132 = scalar_lea.vmem %s0, 256
  %v133 = vld [vmem:[%s132] sm:$0xff]
  %134 = vst [vmem:[%s131] sm:$0xff] %v133
  %s135 = scalar_lea.vmem %s2, 264
  %s136 = scalar_lea.vmem %s0, 264
  %v137 = vld [vmem:[%s136] sm:$0xff]
  %138 = vst [vmem:[%s135] sm:$0xff] %v137
  %s139 = scalar_lea.vmem %s2, 272
  %s140 = scalar_lea.vmem %s0, 272
  %v141 = vld [vmem:[%s140] sm:$0xff]
  %142 = vst [vmem:[%s139] sm:$0xff] %v141
  %s143 = scalar_lea.vmem %s2, 280
  %s144 = scalar_lea.vmem %s0, 280
  %v145 = vld [vmem:[%s144] sm:$0xff]
  %146 = vst [vmem:[%s143] sm:$0xff] %v145
  %s147 = scalar_lea.vmem %s2, 288
  %s148 = scalar_lea.vmem %s0, 288
  %v149 = vld [vmem:[%s148] sm:$0xff]
  %150 = vst [vmem:[%s147] sm:$0xff] %v149
  %s151 = scalar_lea.vmem %s2, 296
  %s152 = scalar_lea.vmem %s0, 296
  %v153 = vld [vmem:[%s152] sm:$0xff]
  %154 = vst [vmem:[%s151] sm:$0xff] %v153
  %s155 = scalar_lea.vmem %s2, 304
  %s156 = scalar_lea.vmem %s0, 304
  %v157 = vld [vmem:[%s156] sm:$0xff]
  %158 = vst [vmem:[%s155] sm:$0xff] %v157
  %s159 = scalar_lea.vmem %s2, 312
  %s160 = scalar_lea.vmem %s0, 312
  %v161 = vld [vmem:[%s160] sm:$0xff]
  %162 = vst [vmem:[%s159] sm:$0xff] %v161
  %s163 = scalar_lea.vmem %s2, 320
  %s164 = scalar_lea.vmem %s0, 320
  %v165 = vld [vmem:[%s164] sm:$0xff]
  %166 = vst [vmem:[%s163] sm:$0xff] %v165
  %s167 = scalar_lea.vmem %s2, 328
  %s168 = scalar_lea.vmem %s0, 328
  %v169 = vld [vmem:[%s168] sm:$0xff]
  %170 = vst [vmem:[%s167] sm:$0xff] %v169
  %s171 = scalar_lea.vmem %s2, 336
  %s172 = scalar_lea.vmem %s0, 336
  %v173 = vld [vmem:[%s172] sm:$0xff]
  %174 = vst [vmem:[%s171] sm:$0xff] %v173
  %s175 = scalar_lea.vmem %s2, 344
  %s176 = scalar_lea.vmem %s0, 344
  %v177 = vld [vmem:[%s176] sm:$0xff]
  %178 = vst [vmem:[%s175] sm:$0xff] %v177
  %s179 = scalar_lea.vmem %s2, 352
  %s180 = scalar_lea.vmem %s0, 352
  %v181 = vld [vmem:[%s180] sm:$0xff]
  %182 = vst [vmem:[%s179] sm:$0xff] %v181
  %s183 = scalar_lea.vmem %s2, 360
  %s184 = scalar_lea.vmem %s0, 360
  %v185 = vld [vmem:[%s184] sm:$0xff]
  %186 = vst [vmem:[%s183] sm:$0xff] %v185
  %s187 = scalar_lea.vmem %s2, 368
  %s188 = scalar_lea.vmem %s0, 368
  %v189 = vld [vmem:[%s188] sm:$0xff]
  %190 = vst [vmem:[%s187] sm:$0xff] %v189
  %s191 = scalar_lea.vmem %s2, 376
  %s192 = scalar_lea.vmem %s0, 376
  %v193 = vld [vmem:[%s192] sm:$0xff]
  %194 = vst [vmem:[%s191] sm:$0xff] %v193
  %s195 = scalar_lea.vmem %s2, 384
  %s196 = scalar_lea.vmem %s0, 384
  %v197 = vld [vmem:[%s196] sm:$0xff]
  %198 = vst [vmem:[%s195] sm:$0xff] %v197
  %s199 = scalar_lea.vmem %s2, 392
  %s200 = scalar_lea.vmem %s0, 392
  %v201 = vld [vmem:[%s200] sm:$0xff]
  %202 = vst [vmem:[%s199] sm:$0xff] %v201
  %s203 = scalar_lea.vmem %s2, 400
  %s204 = scalar_lea.vmem %s0, 400
  %v205 = vld [vmem:[%s204] sm:$0xff]
  %206 = vst [vmem:[%s203] sm:$0xff] %v205
  %s207 = scalar_lea.vmem %s2, 408
  %s208 = scalar_lea.vmem %s0, 408
  %v209 = vld [vmem:[%s208] sm:$0xff]
  %210 = vst [vmem:[%s207] sm:$0xff] %v209
  %s211 = scalar_lea.vmem %s2, 416
  %s212 = scalar_lea.vmem %s0, 416
  %v213 = vld [vmem:[%s212] sm:$0xff]
  %214 = vst [vmem:[%s211] sm:$0xff] %v213
  %s215 = scalar_lea.vmem %s2, 424
  %s216 = scalar_lea.vmem %s0, 424
  %v217 = vld [vmem:[%s216] sm:$0xff]
  %218 = vst [vmem:[%s215] sm:$0xff] %v217
  %s219 = scalar_lea.vmem %s2, 432
  %s220 = scalar_lea.vmem %s0, 432
  %v221 = vld [vmem:[%s220] sm:$0xff]
  %222 = vst [vmem:[%s219] sm:$0xff] %v221
  %s223 = scalar_lea.vmem %s2, 440
  %s224 = scalar_lea.vmem %s0, 440
  %v225 = vld [vmem:[%s224] sm:$0xff]
  %226 = vst [vmem:[%s223] sm:$0xff] %v225
  %s227 = scalar_lea.vmem %s2, 448
  %s228 = scalar_lea.vmem %s0, 448
  %v229 = vld [vmem:[%s228] sm:$0xff]
  %230 = vst [vmem:[%s227] sm:$0xff] %v229
  %s231 = scalar_lea.vmem %s2, 456
  %s232 = scalar_lea.vmem %s0, 456
  %v233 = vld [vmem:[%s232] sm:$0xff]
  %234 = vst [vmem:[%s231] sm:$0xff] %v233
  %s235 = scalar_lea.vmem %s2, 464
  %s236 = scalar_lea.vmem %s0, 464
  %v237 = vld [vmem:[%s236] sm:$0xff]
  %238 = vst [vmem:[%s235] sm:$0xff] %v237
  %s239 = scalar_lea.vmem %s2, 472
  %s240 = scalar_lea.vmem %s0, 472
  %v241 = vld [vmem:[%s240] sm:$0xff]
  %242 = vst [vmem:[%s239] sm:$0xff] %v241
  %s243 = scalar_lea.vmem %s2, 480
  %s244 = scalar_lea.vmem %s0, 480
  %v245 = vld [vmem:[%s244] sm:$0xff]
  %246 = vst [vmem:[%s243] sm:$0xff] %v245
  %s247 = scalar_lea.vmem %s2, 488
  %s248 = scalar_lea.vmem %s0, 488
  %v249 = vld [vmem:[%s248] sm:$0xff]
  %250 = vst [vmem:[%s247] sm:$0xff] %v249
  %s251 = scalar_lea.vmem %s2, 496
  %s252 = scalar_lea.vmem %s0, 496
  %v253 = vld [vmem:[%s252] sm:$0xff]
  %254 = vst [vmem:[%s251] sm:$0xff] %v253
  %s255 = scalar_lea.vmem %s2, 504
  %s256 = scalar_lea.vmem %s0, 504
  %v257 = vld [vmem:[%s256] sm:$0xff]
  %258 = vst [vmem:[%s255] sm:$0xff] %v257
  %s259 = scalar_lea.vmem %s2, 512
  %s260 = scalar_lea.vmem %s0, 512
  %v261 = vld [vmem:[%s260] sm:$0xff]
  %262 = vst [vmem:[%s259] sm:$0xff] %v261
  %s263 = scalar_lea.vmem %s2, 520
  %s264 = scalar_lea.vmem %s0, 520
  %v265 = vld [vmem:[%s264] sm:$0xff]
  %266 = vst [vmem:[%s263] sm:$0xff] %v265
  %s267 = scalar_lea.vmem %s2, 528
  %s268 = scalar_lea.vmem %s0, 528
  %v269 = vld [vmem:[%s268] sm:$0xff]
  %270 = vst [vmem:[%s267] sm:$0xff] %v269
  %s271 = scalar_lea.vmem %s2, 536
  %s272 = scalar_lea.vmem %s0, 536
  %v273 = vld [vmem:[%s272] sm:$0xff]
  %274 = vst [vmem:[%s271] sm:$0xff] %v273
  %s275 = scalar_lea.vmem %s2, 544
  %s276 = scalar_lea.vmem %s0, 544
  %v277 = vld [vmem:[%s276] sm:$0xff]
  %278 = vst [vmem:[%s275] sm:$0xff] %v277
  %s279 = scalar_lea.vmem %s2, 552
  %s280 = scalar_lea.vmem %s0, 552
  %v281 = vld [vmem:[%s280] sm:$0xff]
  %282 = vst [vmem:[%s279] sm:$0xff] %v281
  %s283 = scalar_lea.vmem %s2, 560
  %s284 = scalar_lea.vmem %s0, 560
  %v285 = vld [vmem:[%s284] sm:$0xff]
  %286 = vst [vmem:[%s283] sm:$0xff] %v285
  %s287 = scalar_lea.vmem %s2, 568
  %s288 = scalar_lea.vmem %s0, 568
  %v289 = vld [vmem:[%s288] sm:$0xff]
  %290 = vst [vmem:[%s287] sm:$0xff] %v289
  %s291 = scalar_lea.vmem %s2, 576
  %s292 = scalar_lea.vmem %s0, 576
  %v293 = vld [vmem:[%s292] sm:$0xff]
  %294 = vst [vmem:[%s291] sm:$0xff] %v293
  %s295 = scalar_lea.vmem %s2, 584
  %s296 = scalar_lea.vmem %s0, 584
  %v297 = vld [vmem:[%s296] sm:$0xff]
  %298 = vst [vmem:[%s295] sm:$0xff] %v297
  %s299 = scalar_lea.vmem %s2, 592
  %s300 = scalar_lea.vmem %s0, 592
  %v301 = vld [vmem:[%s300] sm:$0xff]
  %302 = vst [vmem:[%s299] sm:$0xff] %v301
  %s303 = scalar_lea.vmem %s2, 600
  %s304 = scalar_lea.vmem %s0, 600
  %v305 = vld [vmem:[%s304] sm:$0xff]
  %306 = vst [vmem:[%s303] sm:$0xff] %v305
  %s307 = scalar_lea.vmem %s2, 608
  %s308 = scalar_lea.vmem %s0, 608
  %v309 = vld [vmem:[%s308] sm:$0xff]
  %310 = vst [vmem:[%s307] sm:$0xff] %v309
  %s311 = scalar_lea.vmem %s2, 616
  %s312 = scalar_lea.vmem %s0, 616
  %v313 = vld [vmem:[%s312] sm:$0xff]
  %314 = vst [vmem:[%s311] sm:$0xff] %v313
  %s315 = scalar_lea.vmem %s2, 624
  %s316 = scalar_lea.vmem %s0, 624
  %v317 = vld [vmem:[%s316] sm:$0xff]
  %318 = vst [vmem:[%s315] sm:$0xff] %v317
  %s319 = scalar_lea.vmem %s2, 632
  %s320 = scalar_lea.vmem %s0, 632
  %v321 = vld [vmem:[%s320] sm:$0xff]
  %322 = vst [vmem:[%s319] sm:$0xff] %v321
  %s323 = scalar_lea.vmem %s2, 640
  %s324 = scalar_lea.vmem %s0, 640
  %v325 = vld [vmem:[%s324] sm:$0xff]
  %326 = vst [vmem:[%s323] sm:$0xff] %v325
  %s327 = scalar_lea.vmem %s2, 648
  %s328 = scalar_lea.vmem %s0, 648
  %v329 = vld [vmem:[%s328] sm:$0xff]
  %330 = vst [vmem:[%s327] sm:$0xff] %v329
  %s331 = scalar_lea.vmem %s2, 656
  %s332 = scalar_lea.vmem %s0, 656
  %v333 = vld [vmem:[%s332] sm:$0xff]
  %334 = vst [vmem:[%s331] sm:$0xff] %v333
  %s335 = scalar_lea.vmem %s2, 664
  %s336 = scalar_lea.vmem %s0, 664
  %v337 = vld [vmem:[%s336] sm:$0xff]
  %338 = vst [vmem:[%s335] sm:$0xff] %v337
  %s339 = scalar_lea.vmem %s2, 672
  %s340 = scalar_lea.vmem %s0, 672
  %v341 = vld [vmem:[%s340] sm:$0xff]
  %342 = vst [vmem:[%s339] sm:$0xff] %v341
  %s343 = scalar_lea.vmem %s2, 680
  %s344 = scalar_lea.vmem %s0, 680
  %v345 = vld [vmem:[%s344] sm:$0xff]
  %346 = vst [vmem:[%s343] sm:$0xff] %v345
  %s347 = scalar_lea.vmem %s2, 688
  %s348 = scalar_lea.vmem %s0, 688
  %v349 = vld [vmem:[%s348] sm:$0xff]
  %350 = vst [vmem:[%s347] sm:$0xff] %v349
  %s351 = scalar_lea.vmem %s2, 696
  %s352 = scalar_lea.vmem %s0, 696
  %v353 = vld [vmem:[%s352] sm:$0xff]
  %354 = vst [vmem:[%s351] sm:$0xff] %v353
  %s355 = scalar_lea.vmem %s2, 704
  %s356 = scalar_lea.vmem %s0, 704
  %v357 = vld [vmem:[%s356] sm:$0xff]
  %358 = vst [vmem:[%s355] sm:$0xff] %v357
  %s359 = scalar_lea.vmem %s2, 712
  %s360 = scalar_lea.vmem %s0, 712
  %v361 = vld [vmem:[%s360] sm:$0xff]
  %362 = vst [vmem:[%s359] sm:$0xff] %v361
  %s363 = scalar_lea.vmem %s2, 720
  %s364 = scalar_lea.vmem %s0, 720
  %v365 = vld [vmem:[%s364] sm:$0xff]
  %366 = vst [vmem:[%s363] sm:$0xff] %v365
  %s367 = scalar_lea.vmem %s2, 728
  %s368 = scalar_lea.vmem %s0, 728
  %v369 = vld [vmem:[%s368] sm:$0xff]
  %370 = vst [vmem:[%s367] sm:$0xff] %v369
  %s371 = scalar_lea.vmem %s2, 736
  %s372 = scalar_lea.vmem %s0, 736
  %v373 = vld [vmem:[%s372] sm:$0xff]
  %374 = vst [vmem:[%s371] sm:$0xff] %v373
  %s375 = scalar_lea.vmem %s2, 744
  %s376 = scalar_lea.vmem %s0, 744
  %v377 = vld [vmem:[%s376] sm:$0xff]
  %378 = vst [vmem:[%s375] sm:$0xff] %v377
  %s379 = scalar_lea.vmem %s2, 752
  %s380 = scalar_lea.vmem %s0, 752
  %v381 = vld [vmem:[%s380] sm:$0xff]
  %382 = vst [vmem:[%s379] sm:$0xff] %v381
  %s383 = scalar_lea.vmem %s2, 760
  %s384 = scalar_lea.vmem %s0, 760
  %v385 = vld [vmem:[%s384] sm:$0xff]
  %386 = vst [vmem:[%s383] sm:$0xff] %v385
  %s387 = scalar_lea.vmem %s2, 768
  %s388 = scalar_lea.vmem %s0, 768
  %v389 = vld [vmem:[%s388] sm:$0xff]
  %390 = vst [vmem:[%s387] sm:$0xff] %v389
  %s391 = scalar_lea.vmem %s2, 776
  %s392 = scalar_lea.vmem %s0, 776
  %v393 = vld [vmem:[%s392] sm:$0xff]
  %394 = vst [vmem:[%s391] sm:$0xff] %v393
  %s395 = scalar_lea.vmem %s2, 784
  %s396 = scalar_lea.vmem %s0, 784
  %v397 = vld [vmem:[%s396] sm:$0xff]
  %398 = vst [vmem:[%s395] sm:$0xff] %v397
  %s399 = scalar_lea.vmem %s2, 792
  %s400 = scalar_lea.vmem %s0, 792
  %v401 = vld [vmem:[%s400] sm:$0xff]
  %402 = vst [vmem:[%s399] sm:$0xff] %v401
  %s403 = scalar_lea.vmem %s2, 800
  %s404 = scalar_lea.vmem %s0, 800
  %v405 = vld [vmem:[%s404] sm:$0xff]
  %406 = vst [vmem:[%s403] sm:$0xff] %v405
  %s407 = scalar_lea.vmem %s2, 808
  %s408 = scalar_lea.vmem %s0, 808
  %v409 = vld [vmem:[%s408] sm:$0xff]
  %410 = vst [vmem:[%s407] sm:$0xff] %v409
  %s411 = scalar_lea.vmem %s2, 816
  %s412 = scalar_lea.vmem %s0, 816
  %v413 = vld [vmem:[%s412] sm:$0xff]
  %414 = vst [vmem:[%s411] sm:$0xff] %v413
  %s415 = scalar_lea.vmem %s2, 824
  %s416 = scalar_lea.vmem %s0, 824
  %v417 = vld [vmem:[%s416] sm:$0xff]
  %418 = vst [vmem:[%s415] sm:$0xff] %v417
  %s419 = scalar_lea.vmem %s2, 832
  %s420 = scalar_lea.vmem %s0, 832
  %v421 = vld [vmem:[%s420] sm:$0xff]
  %422 = vst [vmem:[%s419] sm:$0xff] %v421
  %s423 = scalar_lea.vmem %s2, 840
  %s424 = scalar_lea.vmem %s0, 840
  %v425 = vld [vmem:[%s424] sm:$0xff]
  %426 = vst [vmem:[%s423] sm:$0xff] %v425
  %s427 = scalar_lea.vmem %s2, 848
  %s428 = scalar_lea.vmem %s0, 848
  %v429 = vld [vmem:[%s428] sm:$0xff]
  %430 = vst [vmem:[%s427] sm:$0xff] %v429
  %s431 = scalar_lea.vmem %s2, 856
  %s432 = scalar_lea.vmem %s0, 856
  %v433 = vld [vmem:[%s432] sm:$0xff]
  %434 = vst [vmem:[%s431] sm:$0xff] %v433
  %s435 = scalar_lea.vmem %s2, 864
  %s436 = scalar_lea.vmem %s0, 864
  %v437 = vld [vmem:[%s436] sm:$0xff]
  %438 = vst [vmem:[%s435] sm:$0xff] %v437
  %s439 = scalar_lea.vmem %s2, 872
  %s440 = scalar_lea.vmem %s0, 872
  %v441 = vld [vmem:[%s440] sm:$0xff]
  %442 = vst [vmem:[%s439] sm:$0xff] %v441
  %s443 = scalar_lea.vmem %s2, 880
  %s444 = scalar_lea.vmem %s0, 880
  %v445 = vld [vmem:[%s444] sm:$0xff]
  %446 = vst [vmem:[%s443] sm:$0xff] %v445
  %s447 = scalar_lea.vmem %s2, 888
  %s448 = scalar_lea.vmem %s0, 888
  %v449 = vld [vmem:[%s448] sm:$0xff]
  %450 = vst [vmem:[%s447] sm:$0xff] %v449
  %s451 = scalar_lea.vmem %s2, 896
  %s452 = scalar_lea.vmem %s0, 896
  %v453 = vld [vmem:[%s452] sm:$0xff]
  %454 = vst [vmem:[%s451] sm:$0xff] %v453
  %s455 = scalar_lea.vmem %s2, 904
  %s456 = scalar_lea.vmem %s0, 904
  %v457 = vld [vmem:[%s456] sm:$0xff]
  %458 = vst [vmem:[%s455] sm:$0xff] %v457
  %s459 = scalar_lea.vmem %s2, 912
  %s460 = scalar_lea.vmem %s0, 912
  %v461 = vld [vmem:[%s460] sm:$0xff]
  %462 = vst [vmem:[%s459] sm:$0xff] %v461
  %s463 = scalar_lea.vmem %s2, 920
  %s464 = scalar_lea.vmem %s0, 920
  %v465 = vld [vmem:[%s464] sm:$0xff]
  %466 = vst [vmem:[%s463] sm:$0xff] %v465
  %s467 = scalar_lea.vmem %s2, 928
  %s468 = scalar_lea.vmem %s0, 928
  %v469 = vld [vmem:[%s468] sm:$0xff]
  %470 = vst [vmem:[%s467] sm:$0xff] %v469
  %s471 = scalar_lea.vmem %s2, 936
  %s472 = scalar_lea.vmem %s0, 936
  %v473 = vld [vmem:[%s472] sm:$0xff]
  %474 = vst [vmem:[%s471] sm:$0xff] %v473
  %s475 = scalar_lea.vmem %s2, 944
  %s476 = scalar_lea.vmem %s0, 944
  %v477 = vld [vmem:[%s476] sm:$0xff]
  %478 = vst [vmem:[%s475] sm:$0xff] %v477
  %s479 = scalar_lea.vmem %s2, 952
  %s480 = scalar_lea.vmem %s0, 952
  %v481 = vld [vmem:[%s480] sm:$0xff]
  %482 = vst [vmem:[%s479] sm:$0xff] %v481
  %s483 = scalar_lea.vmem %s2, 960
  %s484 = scalar_lea.vmem %s0, 960
  %v485 = vld [vmem:[%s484] sm:$0xff]
  %486 = vst [vmem:[%s483] sm:$0xff] %v485
  %s487 = scalar_lea.vmem %s2, 968
  %s488 = scalar_lea.vmem %s0, 968
  %v489 = vld [vmem:[%s488] sm:$0xff]
  %490 = vst [vmem:[%s487] sm:$0xff] %v489
  %s491 = scalar_lea.vmem %s2, 976
  %s492 = scalar_lea.vmem %s0, 976
  %v493 = vld [vmem:[%s492] sm:$0xff]
  %494 = vst [vmem:[%s491] sm:$0xff] %v493
  %s495 = scalar_lea.vmem %s2, 984
  %s496 = scalar_lea.vmem %s0, 984
  %v497 = vld [vmem:[%s496] sm:$0xff]
  %498 = vst [vmem:[%s495] sm:$0xff] %v497
  %s499 = scalar_lea.vmem %s2, 992
  %s500 = scalar_lea.vmem %s0, 992
  %v501 = vld [vmem:[%s500] sm:$0xff]
  %502 = vst [vmem:[%s499] sm:$0xff] %v501
  %s503 = scalar_lea.vmem %s2, 1000
  %s504 = scalar_lea.vmem %s0, 1000
  %v505 = vld [vmem:[%s504] sm:$0xff]
  %506 = vst [vmem:[%s503] sm:$0xff] %v505
  %s507 = scalar_lea.vmem %s2, 1008
  %s508 = scalar_lea.vmem %s0, 1008
  %v509 = vld [vmem:[%s508] sm:$0xff]
  %510 = vst [vmem:[%s507] sm:$0xff] %v509
  %s511 = scalar_lea.vmem %s2, 1016
  %s512 = scalar_lea.vmem %s0, 1016
  %v513 = vld [vmem:[%s512] sm:$0xff]
  %514 = vst [vmem:[%s511] sm:$0xff] %v513
  %s515 = scalar_lea.vmem %s2, 1024
  %s516 = scalar_lea.vmem %s0, 1024
  %v517 = vld [vmem:[%s516] sm:$0xff]
  %518 = vst [vmem:[%s515] sm:$0xff] %v517
  %s519 = scalar_lea.vmem %s2, 1032
  %s520 = scalar_lea.vmem %s0, 1032
  %v521 = vld [vmem:[%s520] sm:$0xff]
  %522 = vst [vmem:[%s519] sm:$0xff] %v521
  %s523 = scalar_lea.vmem %s2, 1040
  %s524 = scalar_lea.vmem %s0, 1040
  %v525 = vld [vmem:[%s524] sm:$0xff]
  %526 = vst [vmem:[%s523] sm:$0xff] %v525
  %s527 = scalar_lea.vmem %s2, 1048
  %s528 = scalar_lea.vmem %s0, 1048
  %v529 = vld [vmem:[%s528] sm:$0xff]
  %530 = vst [vmem:[%s527] sm:$0xff] %v529
  %s531 = scalar_lea.vmem %s2, 1056
  %s532 = scalar_lea.vmem %s0, 1056
  %v533 = vld [vmem:[%s532] sm:$0xff]
  %534 = vst [vmem:[%s531] sm:$0xff] %v533
  %s535 = scalar_lea.vmem %s2, 1064
  %s536 = scalar_lea.vmem %s0, 1064
  %v537 = vld [vmem:[%s536] sm:$0xff]
  %538 = vst [vmem:[%s535] sm:$0xff] %v537
  %s539 = scalar_lea.vmem %s2, 1072
  %s540 = scalar_lea.vmem %s0, 1072
  %v541 = vld [vmem:[%s540] sm:$0xff]
  %542 = vst [vmem:[%s539] sm:$0xff] %v541
  %s543 = scalar_lea.vmem %s2, 1080
  %s544 = scalar_lea.vmem %s0, 1080
  %v545 = vld [vmem:[%s544] sm:$0xff]
  %546 = vst [vmem:[%s543] sm:$0xff] %v545
  %s547 = scalar_lea.vmem %s2, 1088
  %s548 = scalar_lea.vmem %s0, 1088
  %v549 = vld [vmem:[%s548] sm:$0xff]
  %550 = vst [vmem:[%s547] sm:$0xff] %v549
  %s551 = scalar_lea.vmem %s2, 1096
  %s552 = scalar_lea.vmem %s0, 1096
  %v553 = vld [vmem:[%s552] sm:$0xff]
  %554 = vst [vmem:[%s551] sm:$0xff] %v553
  %s555 = scalar_lea.vmem %s2, 1104
  %s556 = scalar_lea.vmem %s0, 1104
  %v557 = vld [vmem:[%s556] sm:$0xff]
  %558 = vst [vmem:[%s555] sm:$0xff] %v557
  %s559 = scalar_lea.vmem %s2, 1112
  %s560 = scalar_lea.vmem %s0, 1112
  %v561 = vld [vmem:[%s560] sm:$0xff]
  %562 = vst [vmem:[%s559] sm:$0xff] %v561
  %s563 = scalar_lea.vmem %s2, 1120
  %s564 = scalar_lea.vmem %s0, 1120
  %v565 = vld [vmem:[%s564] sm:$0xff]
  %566 = vst [vmem:[%s563] sm:$0xff] %v565
  %s567 = scalar_lea.vmem %s2, 1128
  %s568 = scalar_lea.vmem %s0, 1128
  %v569 = vld [vmem:[%s568] sm:$0xff]
  %570 = vst [vmem:[%s567] sm:$0xff] %v569
  %s571 = scalar_lea.vmem %s2, 1136
  %s572 = scalar_lea.vmem %s0, 1136
  %v573 = vld [vmem:[%s572] sm:$0xff]
  %574 = vst [vmem:[%s571] sm:$0xff] %v573
  %s575 = scalar_lea.vmem %s2, 1144
  %s576 = scalar_lea.vmem %s0, 1144
  %v577 = vld [vmem:[%s576] sm:$0xff]
  %578 = vst [vmem:[%s575] sm:$0xff] %v577
  %s579 = scalar_lea.vmem %s2, 1152
  %s580 = scalar_lea.vmem %s0, 1152
  %v581 = vld [vmem:[%s580] sm:$0xff]
  %582 = vst [vmem:[%s579] sm:$0xff] %v581
  %s583 = scalar_lea.vmem %s2, 1160
  %s584 = scalar_lea.vmem %s0, 1160
  %v585 = vld [vmem:[%s584] sm:$0xff]
  %586 = vst [vmem:[%s583] sm:$0xff] %v585
  %s587 = scalar_lea.vmem %s2, 1168
  %s588 = scalar_lea.vmem %s0, 1168
  %v589 = vld [vmem:[%s588] sm:$0xff]
  %590 = vst [vmem:[%s587] sm:$0xff] %v589
  %s591 = scalar_lea.vmem %s2, 1176
  %s592 = scalar_lea.vmem %s0, 1176
  %v593 = vld [vmem:[%s592] sm:$0xff]
  %594 = vst [vmem:[%s591] sm:$0xff] %v593
  %s595 = scalar_lea.vmem %s2, 1184
  %s596 = scalar_lea.vmem %s0, 1184
  %v597 = vld [vmem:[%s596] sm:$0xff]
  %598 = vst [vmem:[%s595] sm:$0xff] %v597
  %s599 = scalar_lea.vmem %s2, 1192
  %s600 = scalar_lea.vmem %s0, 1192
  %v601 = vld [vmem:[%s600] sm:$0xff]
  %602 = vst [vmem:[%s599] sm:$0xff] %v601
  %s603 = scalar_lea.vmem %s2, 1200
  %s604 = scalar_lea.vmem %s0, 1200
  %v605 = vld [vmem:[%s604] sm:$0xff]
  %606 = vst [vmem:[%s603] sm:$0xff] %v605
  %s607 = scalar_lea.vmem %s2, 1208
  %s608 = scalar_lea.vmem %s0, 1208
  %v609 = vld [vmem:[%s608] sm:$0xff]
  %610 = vst [vmem:[%s607] sm:$0xff] %v609
  %s611 = scalar_lea.vmem %s2, 1216
  %s612 = scalar_lea.vmem %s0, 1216
  %v613 = vld [vmem:[%s612] sm:$0xff]
  %614 = vst [vmem:[%s611] sm:$0xff] %v613
  %s615 = scalar_lea.vmem %s2, 1224
  %s616 = scalar_lea.vmem %s0, 1224
  %v617 = vld [vmem:[%s616] sm:$0xff]
  %618 = vst [vmem:[%s615] sm:$0xff] %v617
  %s619 = scalar_lea.vmem %s2, 1232
  %s620 = scalar_lea.vmem %s0, 1232
  %v621 = vld [vmem:[%s620] sm:$0xff]
  %622 = vst [vmem:[%s619] sm:$0xff] %v621
  %s623 = scalar_lea.vmem %s2, 1240
  %s624 = scalar_lea.vmem %s0, 1240
  %v625 = vld [vmem:[%s624] sm:$0xff]
  %626 = vst [vmem:[%s623] sm:$0xff] %v625
  %s627 = scalar_lea.vmem %s2, 1248
  %s628 = scalar_lea.vmem %s0, 1248
  %v629 = vld [vmem:[%s628] sm:$0xff]
  %630 = vst [vmem:[%s627] sm:$0xff] %v629
  %s631 = scalar_lea.vmem %s2, 1256
  %s632 = scalar_lea.vmem %s0, 1256
  %v633 = vld [vmem:[%s632] sm:$0xff]
  %634 = vst [vmem:[%s631] sm:$0xff] %v633
  %s635 = scalar_lea.vmem %s2, 1264
  %s636 = scalar_lea.vmem %s0, 1264
  %v637 = vld [vmem:[%s636] sm:$0xff]
  %638 = vst [vmem:[%s635] sm:$0xff] %v637
  %s639 = scalar_lea.vmem %s2, 1272
  %s640 = scalar_lea.vmem %s0, 1272
  %v641 = vld [vmem:[%s640] sm:$0xff]
  %642 = vst [vmem:[%s639] sm:$0xff] %v641
  %s643 = scalar_lea.vmem %s2, 1280
  %s644 = scalar_lea.vmem %s0, 1280
  %v645 = vld [vmem:[%s644] sm:$0xff]
  %646 = vst [vmem:[%s643] sm:$0xff] %v645
  %s647 = scalar_lea.vmem %s2, 1288
  %s648 = scalar_lea.vmem %s0, 1288
  %v649 = vld [vmem:[%s648] sm:$0xff]
  %650 = vst [vmem:[%s647] sm:$0xff] %v649
  %s651 = scalar_lea.vmem %s2, 1296
  %s652 = scalar_lea.vmem %s0, 1296
  %v653 = vld [vmem:[%s652] sm:$0xff]
  %654 = vst [vmem:[%s651] sm:$0xff] %v653
  %s655 = scalar_lea.vmem %s2, 1304
  %s656 = scalar_lea.vmem %s0, 1304
  %v657 = vld [vmem:[%s656] sm:$0xff]
  %658 = vst [vmem:[%s655] sm:$0xff] %v657
  %s659 = scalar_lea.vmem %s2, 1312
  %s660 = scalar_lea.vmem %s0, 1312
  %v661 = vld [vmem:[%s660] sm:$0xff]
  %662 = vst [vmem:[%s659] sm:$0xff] %v661
  %s663 = scalar_lea.vmem %s2, 1320
  %s664 = scalar_lea.vmem %s0, 1320
  %v665 = vld [vmem:[%s664] sm:$0xff]
  %666 = vst [vmem:[%s663] sm:$0xff] %v665
  %s667 = scalar_lea.vmem %s2, 1328
  %s668 = scalar_lea.vmem %s0, 1328
  %v669 = vld [vmem:[%s668] sm:$0xff]
  %670 = vst [vmem:[%s667] sm:$0xff] %v669
  %s671 = scalar_lea.vmem %s2, 1336
  %s672 = scalar_lea.vmem %s0, 1336
  %v673 = vld [vmem:[%s672] sm:$0xff]
  %674 = vst [vmem:[%s671] sm:$0xff] %v673
  %s675 = scalar_lea.vmem %s2, 1344
  %s676 = scalar_lea.vmem %s0, 1344
  %v677 = vld [vmem:[%s676] sm:$0xff]
  %678 = vst [vmem:[%s675] sm:$0xff] %v677
  %s679 = scalar_lea.vmem %s2, 1352
  %s680 = scalar_lea.vmem %s0, 1352
  %v681 = vld [vmem:[%s680] sm:$0xff]
  %682 = vst [vmem:[%s679] sm:$0xff] %v681
  %s683 = scalar_lea.vmem %s2, 1360
  %s684 = scalar_lea.vmem %s0, 1360
  %v685 = vld [vmem:[%s684] sm:$0xff]
  %686 = vst [vmem:[%s683] sm:$0xff] %v685
  %s687 = scalar_lea.vmem %s2, 1368
  %s688 = scalar_lea.vmem %s0, 1368
  %v689 = vld [vmem:[%s688] sm:$0xff]
  %690 = vst [vmem:[%s687] sm:$0xff] %v689
  %s691 = scalar_lea.vmem %s2, 1376
  %s692 = scalar_lea.vmem %s0, 1376
  %v693 = vld [vmem:[%s692] sm:$0xff]
  %694 = vst [vmem:[%s691] sm:$0xff] %v693
  %s695 = scalar_lea.vmem %s2, 1384
  %s696 = scalar_lea.vmem %s0, 1384
  %v697 = vld [vmem:[%s696] sm:$0xff]
  %698 = vst [vmem:[%s695] sm:$0xff] %v697
  %s699 = scalar_lea.vmem %s2, 1392
  %s700 = scalar_lea.vmem %s0, 1392
  %v701 = vld [vmem:[%s700] sm:$0xff]
  %702 = vst [vmem:[%s699] sm:$0xff] %v701
  %s703 = scalar_lea.vmem %s2, 1400
  %s704 = scalar_lea.vmem %s0, 1400
  %v705 = vld [vmem:[%s704] sm:$0xff]
  %706 = vst [vmem:[%s703] sm:$0xff] %v705
  %s707 = scalar_lea.vmem %s2, 1408
  %s708 = scalar_lea.vmem %s0, 1408
  %v709 = vld [vmem:[%s708] sm:$0xff]
  %710 = vst [vmem:[%s707] sm:$0xff] %v709
  %s711 = scalar_lea.vmem %s2, 1416
  %s712 = scalar_lea.vmem %s0, 1416
  %v713 = vld [vmem:[%s712] sm:$0xff]
  %714 = vst [vmem:[%s711] sm:$0xff] %v713
  %s715 = scalar_lea.vmem %s2, 1424
  %s716 = scalar_lea.vmem %s0, 1424
  %v717 = vld [vmem:[%s716] sm:$0xff]
  %718 = vst [vmem:[%s715] sm:$0xff] %v717
  %s719 = scalar_lea.vmem %s2, 1432
  %s720 = scalar_lea.vmem %s0, 1432
  %v721 = vld [vmem:[%s720] sm:$0xff]
  %722 = vst [vmem:[%s719] sm:$0xff] %v721
  %s723 = scalar_lea.vmem %s2, 1440
  %s724 = scalar_lea.vmem %s0, 1440
  %v725 = vld [vmem:[%s724] sm:$0xff]
  %726 = vst [vmem:[%s723] sm:$0xff] %v725
  %s727 = scalar_lea.vmem %s2, 1448
  %s728 = scalar_lea.vmem %s0, 1448
  %v729 = vld [vmem:[%s728] sm:$0xff]
  %730 = vst [vmem:[%s727] sm:$0xff] %v729
  %s731 = scalar_lea.vmem %s2, 1456
  %s732 = scalar_lea.vmem %s0, 1456
  %v733 = vld [vmem:[%s732] sm:$0xff]
  %734 = vst [vmem:[%s731] sm:$0xff] %v733
  %s735 = scalar_lea.vmem %s2, 1464
  %s736 = scalar_lea.vmem %s0, 1464
  %v737 = vld [vmem:[%s736] sm:$0xff]
  %738 = vst [vmem:[%s735] sm:$0xff] %v737
  %s739 = scalar_lea.vmem %s2, 1472
  %s740 = scalar_lea.vmem %s0, 1472
  %v741 = vld [vmem:[%s740] sm:$0xff]
  %742 = vst [vmem:[%s739] sm:$0xff] %v741
  %s743 = scalar_lea.vmem %s2, 1480
  %s744 = scalar_lea.vmem %s0, 1480
  %v745 = vld [vmem:[%s744] sm:$0xff]
  %746 = vst [vmem:[%s743] sm:$0xff] %v745
  %s747 = scalar_lea.vmem %s2, 1488
  %s748 = scalar_lea.vmem %s0, 1488
  %v749 = vld [vmem:[%s748] sm:$0xff]
  %750 = vst [vmem:[%s747] sm:$0xff] %v749
  %s751 = scalar_lea.vmem %s2, 1496
  %s752 = scalar_lea.vmem %s0, 1496
  %v753 = vld [vmem:[%s752] sm:$0xff]
  %754 = vst [vmem:[%s751] sm:$0xff] %v753
  %s755 = scalar_lea.vmem %s2, 1504
  %s756 = scalar_lea.vmem %s0, 1504
  %v757 = vld [vmem:[%s756] sm:$0xff]
  %758 = vst [vmem:[%s755] sm:$0xff] %v757
  %s759 = scalar_lea.vmem %s2, 1512
  %s760 = scalar_lea.vmem %s0, 1512
  %v761 = vld [vmem:[%s760] sm:$0xff]
  %762 = vst [vmem:[%s759] sm:$0xff] %v761
  %s763 = scalar_lea.vmem %s2, 1520
  %s764 = scalar_lea.vmem %s0, 1520
  %v765 = vld [vmem:[%s764] sm:$0xff]
  %766 = vst [vmem:[%s763] sm:$0xff] %v765
  %s767 = scalar_lea.vmem %s2, 1528
  %s768 = scalar_lea.vmem %s0, 1528
  %v769 = vld [vmem:[%s768] sm:$0xff]
  %770 = vst [vmem:[%s767] sm:$0xff] %v769
  %s771 = scalar_lea.vmem %s2, 1536
  %s772 = scalar_lea.vmem %s0, 1536
  %v773 = vld [vmem:[%s772] sm:$0xff]
  %774 = vst [vmem:[%s771] sm:$0xff] %v773
  %s775 = scalar_lea.vmem %s2, 1544
  %s776 = scalar_lea.vmem %s0, 1544
  %v777 = vld [vmem:[%s776] sm:$0xff]
  %778 = vst [vmem:[%s775] sm:$0xff] %v777
  %s779 = scalar_lea.vmem %s2, 1552
  %s780 = scalar_lea.vmem %s0, 1552
  %v781 = vld [vmem:[%s780] sm:$0xff]
  %782 = vst [vmem:[%s779] sm:$0xff] %v781
  %s783 = scalar_lea.vmem %s2, 1560
  %s784 = scalar_lea.vmem %s0, 1560
  %v785 = vld [vmem:[%s784] sm:$0xff]
  %786 = vst [vmem:[%s783] sm:$0xff] %v785
  %s787 = scalar_lea.vmem %s2, 1568
  %s788 = scalar_lea.vmem %s0, 1568
  %v789 = vld [vmem:[%s788] sm:$0xff]
  %790 = vst [vmem:[%s787] sm:$0xff] %v789
  %s791 = scalar_lea.vmem %s2, 1576
  %s792 = scalar_lea.vmem %s0, 1576
  %v793 = vld [vmem:[%s792] sm:$0xff]
  %794 = vst [vmem:[%s791] sm:$0xff] %v793
  %s795 = scalar_lea.vmem %s2, 1584
  %s796 = scalar_lea.vmem %s0, 1584
  %v797 = vld [vmem:[%s796] sm:$0xff]
  %798 = vst [vmem:[%s795] sm:$0xff] %v797
  %s799 = scalar_lea.vmem %s2, 1592
  %s800 = scalar_lea.vmem %s0, 1592
  %v801 = vld [vmem:[%s800] sm:$0xff]
  %802 = vst [vmem:[%s799] sm:$0xff] %v801
  %s803 = scalar_lea.vmem %s2, 1600
  %s804 = scalar_lea.vmem %s0, 1600
  %v805 = vld [vmem:[%s804] sm:$0xff]
  %806 = vst [vmem:[%s803] sm:$0xff] %v805
  %s807 = scalar_lea.vmem %s2, 1608
  %s808 = scalar_lea.vmem %s0, 1608
  %v809 = vld [vmem:[%s808] sm:$0xff]
  %810 = vst [vmem:[%s807] sm:$0xff] %v809
  %s811 = scalar_lea.vmem %s2, 1616
  %s812 = scalar_lea.vmem %s0, 1616
  %v813 = vld [vmem:[%s812] sm:$0xff]
  %814 = vst [vmem:[%s811] sm:$0xff] %v813
  %s815 = scalar_lea.vmem %s2, 1624
  %s816 = scalar_lea.vmem %s0, 1624
  %v817 = vld [vmem:[%s816] sm:$0xff]
  %818 = vst [vmem:[%s815] sm:$0xff] %v817
  %s819 = scalar_lea.vmem %s2, 1632
  %s820 = scalar_lea.vmem %s0, 1632
  %v821 = vld [vmem:[%s820] sm:$0xff]
  %822 = vst [vmem:[%s819] sm:$0xff] %v821
  %s823 = scalar_lea.vmem %s2, 1640
  %s824 = scalar_lea.vmem %s0, 1640
  %v825 = vld [vmem:[%s824] sm:$0xff]
  %826 = vst [vmem:[%s823] sm:$0xff] %v825
  %s827 = scalar_lea.vmem %s2, 1648
  %s828 = scalar_lea.vmem %s0, 1648
  %v829 = vld [vmem:[%s828] sm:$0xff]
  %830 = vst [vmem:[%s827] sm:$0xff] %v829
  %s831 = scalar_lea.vmem %s2, 1656
  %s832 = scalar_lea.vmem %s0, 1656
  %v833 = vld [vmem:[%s832] sm:$0xff]
  %834 = vst [vmem:[%s831] sm:$0xff] %v833
  %s835 = scalar_lea.vmem %s2, 1664
  %s836 = scalar_lea.vmem %s0, 1664
  %v837 = vld [vmem:[%s836] sm:$0xff]
  %838 = vst [vmem:[%s835] sm:$0xff] %v837
  %s839 = scalar_lea.vmem %s2, 1672
  %s840 = scalar_lea.vmem %s0, 1672
  %v841 = vld [vmem:[%s840] sm:$0xff]
  %842 = vst [vmem:[%s839] sm:$0xff] %v841
  %s843 = scalar_lea.vmem %s2, 1680
  %s844 = scalar_lea.vmem %s0, 1680
  %v845 = vld [vmem:[%s844] sm:$0xff]
  %846 = vst [vmem:[%s843] sm:$0xff] %v845
  %s847 = scalar_lea.vmem %s2, 1688
  %s848 = scalar_lea.vmem %s0, 1688
  %v849 = vld [vmem:[%s848] sm:$0xff]
  %850 = vst [vmem:[%s847] sm:$0xff] %v849
  %s851 = scalar_lea.vmem %s2, 1696
  %s852 = scalar_lea.vmem %s0, 1696
  %v853 = vld [vmem:[%s852] sm:$0xff]
  %854 = vst [vmem:[%s851] sm:$0xff] %v853
  %s855 = scalar_lea.vmem %s2, 1704
  %s856 = scalar_lea.vmem %s0, 1704
  %v857 = vld [vmem:[%s856] sm:$0xff]
  %858 = vst [vmem:[%s855] sm:$0xff] %v857
  %s859 = scalar_lea.vmem %s2, 1712
  %s860 = scalar_lea.vmem %s0, 1712
  %v861 = vld [vmem:[%s860] sm:$0xff]
  %862 = vst [vmem:[%s859] sm:$0xff] %v861
  %s863 = scalar_lea.vmem %s2, 1720
  %s864 = scalar_lea.vmem %s0, 1720
  %v865 = vld [vmem:[%s864] sm:$0xff]
  %866 = vst [vmem:[%s863] sm:$0xff] %v865
  %s867 = scalar_lea.vmem %s2, 1728
  %s868 = scalar_lea.vmem %s0, 1728
  %v869 = vld [vmem:[%s868] sm:$0xff]
  %870 = vst [vmem:[%s867] sm:$0xff] %v869
  %s871 = scalar_lea.vmem %s2, 1736
  %s872 = scalar_lea.vmem %s0, 1736
  %v873 = vld [vmem:[%s872] sm:$0xff]
  %874 = vst [vmem:[%s871] sm:$0xff] %v873
  %s875 = scalar_lea.vmem %s2, 1744
  %s876 = scalar_lea.vmem %s0, 1744
  %v877 = vld [vmem:[%s876] sm:$0xff]
  %878 = vst [vmem:[%s875] sm:$0xff] %v877
  %s879 = scalar_lea.vmem %s2, 1752
  %s880 = scalar_lea.vmem %s0, 1752
  %v881 = vld [vmem:[%s880] sm:$0xff]
  %882 = vst [vmem:[%s879] sm:$0xff] %v881
  %s883 = scalar_lea.vmem %s2, 1760
  %s884 = scalar_lea.vmem %s0, 1760
  %v885 = vld [vmem:[%s884] sm:$0xff]
  %886 = vst [vmem:[%s883] sm:$0xff] %v885
  %s887 = scalar_lea.vmem %s2, 1768
  %s888 = scalar_lea.vmem %s0, 1768
  %v889 = vld [vmem:[%s888] sm:$0xff]
  %890 = vst [vmem:[%s887] sm:$0xff] %v889
  %s891 = scalar_lea.vmem %s2, 1776
  %s892 = scalar_lea.vmem %s0, 1776
  %v893 = vld [vmem:[%s892] sm:$0xff]
  %894 = vst [vmem:[%s891] sm:$0xff] %v893
  %s895 = scalar_lea.vmem %s2, 1784
  %s896 = scalar_lea.vmem %s0, 1784
  %v897 = vld [vmem:[%s896] sm:$0xff]
  %898 = vst [vmem:[%s895] sm:$0xff] %v897
  %s899 = scalar_lea.vmem %s2, 1792
  %s900 = scalar_lea.vmem %s0, 1792
  %v901 = vld [vmem:[%s900] sm:$0xff]
  %902 = vst [vmem:[%s899] sm:$0xff] %v901
  %s903 = scalar_lea.vmem %s2, 1800
  %s904 = scalar_lea.vmem %s0, 1800
  %v905 = vld [vmem:[%s904] sm:$0xff]
  %906 = vst [vmem:[%s903] sm:$0xff] %v905
  %s907 = scalar_lea.vmem %s2, 1808
  %s908 = scalar_lea.vmem %s0, 1808
  %v909 = vld [vmem:[%s908] sm:$0xff]
  %910 = vst [vmem:[%s907] sm:$0xff] %v909
  %s911 = scalar_lea.vmem %s2, 1816
  %s912 = scalar_lea.vmem %s0, 1816
  %v913 = vld [vmem:[%s912] sm:$0xff]
  %914 = vst [vmem:[%s911] sm:$0xff] %v913
  %s915 = scalar_lea.vmem %s2, 1824
  %s916 = scalar_lea.vmem %s0, 1824
  %v917 = vld [vmem:[%s916] sm:$0xff]
  %918 = vst [vmem:[%s915] sm:$0xff] %v917
  %s919 = scalar_lea.vmem %s2, 1832
  %s920 = scalar_lea.vmem %s0, 1832
  %v921 = vld [vmem:[%s920] sm:$0xff]
  %922 = vst [vmem:[%s919] sm:$0xff] %v921
  %s923 = scalar_lea.vmem %s2, 1840
  %s924 = scalar_lea.vmem %s0, 1840
  %v925 = vld [vmem:[%s924] sm:$0xff]
  %926 = vst [vmem:[%s923] sm:$0xff] %v925
  %s927 = scalar_lea.vmem %s2, 1848
  %s928 = scalar_lea.vmem %s0, 1848
  %v929 = vld [vmem:[%s928] sm:$0xff]
  %930 = vst [vmem:[%s927] sm:$0xff] %v929
  %s931 = scalar_lea.vmem %s2, 1856
  %s932 = scalar_lea.vmem %s0, 1856
  %v933 = vld [vmem:[%s932] sm:$0xff]
  %934 = vst [vmem:[%s931] sm:$0xff] %v933
  %s935 = scalar_lea.vmem %s2, 1864
  %s936 = scalar_lea.vmem %s0, 1864
  %v937 = vld [vmem:[%s936] sm:$0xff]
  %938 = vst [vmem:[%s935] sm:$0xff] %v937
  %s939 = scalar_lea.vmem %s2, 1872
  %s940 = scalar_lea.vmem %s0, 1872
  %v941 = vld [vmem:[%s940] sm:$0xff]
  %942 = vst [vmem:[%s939] sm:$0xff] %v941
  %s943 = scalar_lea.vmem %s2, 1880
  %s944 = scalar_lea.vmem %s0, 1880
  %v945 = vld [vmem:[%s944] sm:$0xff]
  %946 = vst [vmem:[%s943] sm:$0xff] %v945
  %s947 = scalar_lea.vmem %s2, 1888
  %s948 = scalar_lea.vmem %s0, 1888
  %v949 = vld [vmem:[%s948] sm:$0xff]
  %950 = vst [vmem:[%s947] sm:$0xff] %v949
  %s951 = scalar_lea.vmem %s2, 1896
  %s952 = scalar_lea.vmem %s0, 1896
  %v953 = vld [vmem:[%s952] sm:$0xff]
  %954 = vst [vmem:[%s951] sm:$0xff] %v953
  %s955 = scalar_lea.vmem %s2, 1904
  %s956 = scalar_lea.vmem %s0, 1904
  %v957 = vld [vmem:[%s956] sm:$0xff]
  %958 = vst [vmem:[%s955] sm:$0xff] %v957
  %s959 = scalar_lea.vmem %s2, 1912
  %s960 = scalar_lea.vmem %s0, 1912
  %v961 = vld [vmem:[%s960] sm:$0xff]
  %962 = vst [vmem:[%s959] sm:$0xff] %v961
  %s963 = scalar_lea.vmem %s2, 1920
  %s964 = scalar_lea.vmem %s0, 1920
  %v965 = vld [vmem:[%s964] sm:$0xff]
  %966 = vst [vmem:[%s963] sm:$0xff] %v965
  %s967 = scalar_lea.vmem %s2, 1928
  %s968 = scalar_lea.vmem %s0, 1928
  %v969 = vld [vmem:[%s968] sm:$0xff]
  %970 = vst [vmem:[%s967] sm:$0xff] %v969
  %s971 = scalar_lea.vmem %s2, 1936
  %s972 = scalar_lea.vmem %s0, 1936
  %v973 = vld [vmem:[%s972] sm:$0xff]
  %974 = vst [vmem:[%s971] sm:$0xff] %v973
  %s975 = scalar_lea.vmem %s2, 1944
  %s976 = scalar_lea.vmem %s0, 1944
  %v977 = vld [vmem:[%s976] sm:$0xff]
  %978 = vst [vmem:[%s975] sm:$0xff] %v977
  %s979 = scalar_lea.vmem %s2, 1952
  %s980 = scalar_lea.vmem %s0, 1952
  %v981 = vld [vmem:[%s980] sm:$0xff]
  %982 = vst [vmem:[%s979] sm:$0xff] %v981
  %s983 = scalar_lea.vmem %s2, 1960
  %s984 = scalar_lea.vmem %s0, 1960
  %v985 = vld [vmem:[%s984] sm:$0xff]
  %986 = vst [vmem:[%s983] sm:$0xff] %v985
  %s987 = scalar_lea.vmem %s2, 1968
  %s988 = scalar_lea.vmem %s0, 1968
  %v989 = vld [vmem:[%s988] sm:$0xff]
  %990 = vst [vmem:[%s987] sm:$0xff] %v989
  %s991 = scalar_lea.vmem %s2, 1976
  %s992 = scalar_lea.vmem %s0, 1976
  %v993 = vld [vmem:[%s992] sm:$0xff]
  %994 = vst [vmem:[%s991] sm:$0xff] %v993
  %s995 = scalar_lea.vmem %s2, 1984
  %s996 = scalar_lea.vmem %s0, 1984
  %v997 = vld [vmem:[%s996] sm:$0xff]
  %998 = vst [vmem:[%s995] sm:$0xff] %v997
  %s999 = scalar_lea.vmem %s2, 1992
  %s1000 = scalar_lea.vmem %s0, 1992
  %v1001 = vld [vmem:[%s1000] sm:$0xff]
  %1002 = vst [vmem:[%s999] sm:$0xff] %v1001
  %s1003 = scalar_lea.vmem %s2, 2000
  %s1004 = scalar_lea.vmem %s0, 2000
  %v1005 = vld [vmem:[%s1004] sm:$0xff]
  %1006 = vst [vmem:[%s1003] sm:$0xff] %v1005
  %s1007 = scalar_lea.vmem %s2, 2008
  %s1008 = scalar_lea.vmem %s0, 2008
  %v1009 = vld [vmem:[%s1008] sm:$0xff]
  %1010 = vst [vmem:[%s1007] sm:$0xff] %v1009
  %s1011 = scalar_lea.vmem %s2, 2016
  %s1012 = scalar_lea.vmem %s0, 2016
  %v1013 = vld [vmem:[%s1012] sm:$0xff]
  %1014 = vst [vmem:[%s1011] sm:$0xff] %v1013
  %s1015 = scalar_lea.vmem %s2, 2024
  %s1016 = scalar_lea.vmem %s0, 2024
  %v1017 = vld [vmem:[%s1016] sm:$0xff]
  %1018 = vst [vmem:[%s1015] sm:$0xff] %v1017
  %s1019 = scalar_lea.vmem %s2, 2032
  %s1020 = scalar_lea.vmem %s0, 2032
  %v1021 = vld [vmem:[%s1020] sm:$0xff]
  %1022 = vst [vmem:[%s1019] sm:$0xff] %v1021
  %s1023 = scalar_lea.vmem %s2, 2040
  %s1024 = scalar_lea.vmem %s0, 2040
  %v1025 = vld [vmem:[%s1024] sm:$0xff]
  %1026 = vst [vmem:[%s1023] sm:$0xff] %v1025
  %s1027 = scalar_lea.vmem %s2, 2048
  %s1028 = scalar_lea.vmem %s0, 2048
  %v1029 = vld [vmem:[%s1028] sm:$0xff]
  %1030 = vst [vmem:[%s1027] sm:$0xff] %v1029
  %s1031 = scalar_lea.vmem %s2, 2056
  %s1032 = scalar_lea.vmem %s0, 2056
  %v1033 = vld [vmem:[%s1032] sm:$0xff]
  %1034 = vst [vmem:[%s1031] sm:$0xff] %v1033
  %s1035 = scalar_lea.vmem %s2, 2064
  %s1036 = scalar_lea.vmem %s0, 2064
  %v1037 = vld [vmem:[%s1036] sm:$0xff]
  %1038 = vst [vmem:[%s1035] sm:$0xff] %v1037
  %s1039 = scalar_lea.vmem %s2, 2072
  %s1040 = scalar_lea.vmem %s0, 2072
  %v1041 = vld [vmem:[%s1040] sm:$0xff]
  %1042 = vst [vmem:[%s1039] sm:$0xff] %v1041
  %s1043 = scalar_lea.vmem %s2, 2080
  %s1044 = scalar_lea.vmem %s0, 2080
  %v1045 = vld [vmem:[%s1044] sm:$0xff]
  %1046 = vst [vmem:[%s1043] sm:$0xff] %v1045
  %s1047 = scalar_lea.vmem %s2, 2088
  %s1048 = scalar_lea.vmem %s0, 2088
  %v1049 = vld [vmem:[%s1048] sm:$0xff]
  %1050 = vst [vmem:[%s1047] sm:$0xff] %v1049
  %s1051 = scalar_lea.vmem %s2, 2096
  %s1052 = scalar_lea.vmem %s0, 2096
  %v1053 = vld [vmem:[%s1052] sm:$0xff]
  %1054 = vst [vmem:[%s1051] sm:$0xff] %v1053
  %s1055 = scalar_lea.vmem %s2, 2104
  %s1056 = scalar_lea.vmem %s0, 2104
  %v1057 = vld [vmem:[%s1056] sm:$0xff]
  %1058 = vst [vmem:[%s1055] sm:$0xff] %v1057
  %s1059 = scalar_lea.vmem %s2, 2112
  %s1060 = scalar_lea.vmem %s0, 2112
  %v1061 = vld [vmem:[%s1060] sm:$0xff]
  %1062 = vst [vmem:[%s1059] sm:$0xff] %v1061
  %s1063 = scalar_lea.vmem %s2, 2120
  %s1064 = scalar_lea.vmem %s0, 2120
  %v1065 = vld [vmem:[%s1064] sm:$0xff]
  %1066 = vst [vmem:[%s1063] sm:$0xff] %v1065
  %s1067 = scalar_lea.vmem %s2, 2128
  %s1068 = scalar_lea.vmem %s0, 2128
  %v1069 = vld [vmem:[%s1068] sm:$0xff]
  %1070 = vst [vmem:[%s1067] sm:$0xff] %v1069
  %s1071 = scalar_lea.vmem %s2, 2136
  %s1072 = scalar_lea.vmem %s0, 2136
  %v1073 = vld [vmem:[%s1072] sm:$0xff]
  %1074 = vst [vmem:[%s1071] sm:$0xff] %v1073
  %s1075 = scalar_lea.vmem %s2, 2144
  %s1076 = scalar_lea.vmem %s0, 2144
  %v1077 = vld [vmem:[%s1076] sm:$0xff]
  %1078 = vst [vmem:[%s1075] sm:$0xff] %v1077
  %s1079 = scalar_lea.vmem %s2, 2152
  %s1080 = scalar_lea.vmem %s0, 2152
  %v1081 = vld [vmem:[%s1080] sm:$0xff]
  %1082 = vst [vmem:[%s1079] sm:$0xff] %v1081
  %s1083 = scalar_lea.vmem %s2, 2160
  %s1084 = scalar_lea.vmem %s0, 2160
  %v1085 = vld [vmem:[%s1084] sm:$0xff]
  %1086 = vst [vmem:[%s1083] sm:$0xff] %v1085
  %s1087 = scalar_lea.vmem %s2, 2168
  %s1088 = scalar_lea.vmem %s0, 2168
  %v1089 = vld [vmem:[%s1088] sm:$0xff]
  %1090 = vst [vmem:[%s1087] sm:$0xff] %v1089
  %s1091 = scalar_lea.vmem %s0, 2176
  %v1092 = vld [vmem:[%s1091] sm:$0x3]
  %s1093 = scalar_lea.vmem %s2, 2176
  %vm1094 = vcmask 1041408
  %1095 = vst.msk [vmem:[%s1093] sm:$0xff] %vm1094, %v1092
  %v1096 = vld [vmem:[%s1] sm:$0xff]
  %1097 = vst [vmem:[%s4] sm:$0xff] %v1096
  %s1098 = scalar_lea.vmem %s4, 8
  %s1099 = scalar_lea.vmem %s1, 8
  %v1100 = vld [vmem:[%s1099] sm:$0xff]
  %1101 = vst [vmem:[%s1098] sm:$0xff] %v1100
  %s1102 = scalar_lea.vmem %s4, 16
  %s1103 = scalar_lea.vmem %s1, 16
  %v1104 = vld [vmem:[%s1103] sm:$0xff]
  %1105 = vst [vmem:[%s1102] sm:$0xff] %v1104
  %s1106 = scalar_lea.vmem %s4, 24
  %s1107 = scalar_lea.vmem %s1, 24
  %v1108 = vld [vmem:[%s1107] sm:$0xff]
  %1109 = vst [vmem:[%s1106] sm:$0xff] %v1108
  %s1110 = scalar_lea.vmem %s4, 32
  %s1111 = scalar_lea.vmem %s1, 32
  %v1112 = vld [vmem:[%s1111] sm:$0xff]
  %1113 = vst [vmem:[%s1110] sm:$0xff] %v1112
  %s1114 = scalar_lea.vmem %s4, 40
  %s1115 = scalar_lea.vmem %s1, 40
  %v1116 = vld [vmem:[%s1115] sm:$0xff]
  %1117 = vst [vmem:[%s1114] sm:$0xff] %v1116
  %s1118 = scalar_lea.vmem %s4, 48
  %s1119 = scalar_lea.vmem %s1, 48
  %v1120 = vld [vmem:[%s1119] sm:$0xff]
  %1121 = vst [vmem:[%s1118] sm:$0xff] %v1120
  %s1122 = scalar_lea.vmem %s4, 56
  %s1123 = scalar_lea.vmem %s1, 56
  %v1124 = vld [vmem:[%s1123] sm:$0xff]
  %1125 = vst [vmem:[%s1122] sm:$0xff] %v1124
  %s1126 = scalar_lea.vmem %s4, 64
  %s1127 = scalar_lea.vmem %s1, 64
  %v1128 = vld [vmem:[%s1127] sm:$0xff]
  %1129 = vst [vmem:[%s1126] sm:$0xff] %v1128
  %s1130 = scalar_lea.vmem %s4, 72
  %s1131 = scalar_lea.vmem %s1, 72
  %v1132 = vld [vmem:[%s1131] sm:$0xff]
  %1133 = vst [vmem:[%s1130] sm:$0xff] %v1132
  %s1134 = scalar_lea.vmem %s4, 80
  %s1135 = scalar_lea.vmem %s1, 80
  %v1136 = vld [vmem:[%s1135] sm:$0xff]
  %1137 = vst [vmem:[%s1134] sm:$0xff] %v1136
  %s1138 = scalar_lea.vmem %s4, 88
  %s1139 = scalar_lea.vmem %s1, 88
  %v1140 = vld [vmem:[%s1139] sm:$0xff]
  %1141 = vst [vmem:[%s1138] sm:$0xff] %v1140
  %s1142 = scalar_lea.vmem %s4, 96
  %s1143 = scalar_lea.vmem %s1, 96
  %v1144 = vld [vmem:[%s1143] sm:$0xff]
  %1145 = vst [vmem:[%s1142] sm:$0xff] %v1144
  %s1146 = scalar_lea.vmem %s4, 104
  %s1147 = scalar_lea.vmem %s1, 104
  %v1148 = vld [vmem:[%s1147] sm:$0xff]
  %1149 = vst [vmem:[%s1146] sm:$0xff] %v1148
  %s1150 = scalar_lea.vmem %s4, 112
  %s1151 = scalar_lea.vmem %s1, 112
  %v1152 = vld [vmem:[%s1151] sm:$0xff]
  %1153 = vst [vmem:[%s1150] sm:$0xff] %v1152
  %s1154 = scalar_lea.vmem %s4, 120
  %s1155 = scalar_lea.vmem %s1, 120
  %v1156 = vld [vmem:[%s1155] sm:$0xff]
  %1157 = vst [vmem:[%s1154] sm:$0xff] %v1156
  %s1158 = scalar_lea.vmem %s4, 128
  %s1159 = scalar_lea.vmem %s1, 128
  %v1160 = vld [vmem:[%s1159] sm:$0xff]
  %1161 = vst [vmem:[%s1158] sm:$0xff] %v1160
  %s1162 = scalar_lea.vmem %s4, 136
  %s1163 = scalar_lea.vmem %s1, 136
  %v1164 = vld [vmem:[%s1163] sm:$0xff]
  %1165 = vst [vmem:[%s1162] sm:$0xff] %v1164
  %s1166 = scalar_lea.vmem %s4, 144
  %s1167 = scalar_lea.vmem %s1, 144
  %v1168 = vld [vmem:[%s1167] sm:$0xff]
  %1169 = vst [vmem:[%s1166] sm:$0xff] %v1168
  %s1170 = scalar_lea.vmem %s4, 152
  %s1171 = scalar_lea.vmem %s1, 152
  %v1172 = vld [vmem:[%s1171] sm:$0xff]
  %1173 = vst [vmem:[%s1170] sm:$0xff] %v1172
  %s1174 = scalar_lea.vmem %s4, 160
  %s1175 = scalar_lea.vmem %s1, 160
  %v1176 = vld [vmem:[%s1175] sm:$0xff]
  %1177 = vst [vmem:[%s1174] sm:$0xff] %v1176
  %s1178 = scalar_lea.vmem %s4, 168
  %s1179 = scalar_lea.vmem %s1, 168
  %v1180 = vld [vmem:[%s1179] sm:$0xff]
  %1181 = vst [vmem:[%s1178] sm:$0xff] %v1180
  %s1182 = scalar_lea.vmem %s4, 176
  %s1183 = scalar_lea.vmem %s1, 176
  %v1184 = vld [vmem:[%s1183] sm:$0xff]
  %1185 = vst [vmem:[%s1182] sm:$0xff] %v1184
  %s1186 = scalar_lea.vmem %s4, 184
  %s1187 = scalar_lea.vmem %s1, 184
  %v1188 = vld [vmem:[%s1187] sm:$0xff]
  %1189 = vst [vmem:[%s1186] sm:$0xff] %v1188
  %s1190 = scalar_lea.vmem %s4, 192
  %s1191 = scalar_lea.vmem %s1, 192
  %v1192 = vld [vmem:[%s1191] sm:$0xff]
  %1193 = vst [vmem:[%s1190] sm:$0xff] %v1192
  %s1194 = scalar_lea.vmem %s4, 200
  %s1195 = scalar_lea.vmem %s1, 200
  %v1196 = vld [vmem:[%s1195] sm:$0xff]
  %1197 = vst [vmem:[%s1194] sm:$0xff] %v1196
  %s1198 = scalar_lea.vmem %s4, 208
  %s1199 = scalar_lea.vmem %s1, 208
  %v1200 = vld [vmem:[%s1199] sm:$0xff]
  %1201 = vst [vmem:[%s1198] sm:$0xff] %v1200
  %s1202 = scalar_lea.vmem %s4, 216
  %s1203 = scalar_lea.vmem %s1, 216
  %v1204 = vld [vmem:[%s1203] sm:$0xff]
  %1205 = vst [vmem:[%s1202] sm:$0xff] %v1204
  %s1206 = scalar_lea.vmem %s4, 224
  %s1207 = scalar_lea.vmem %s1, 224
  %v1208 = vld [vmem:[%s1207] sm:$0xff]
  %1209 = vst [vmem:[%s1206] sm:$0xff] %v1208
  %s1210 = scalar_lea.vmem %s4, 232
  %s1211 = scalar_lea.vmem %s1, 232
  %v1212 = vld [vmem:[%s1211] sm:$0xff]
  %1213 = vst [vmem:[%s1210] sm:$0xff] %v1212
  %s1214 = scalar_lea.vmem %s4, 240
  %s1215 = scalar_lea.vmem %s1, 240
  %v1216 = vld [vmem:[%s1215] sm:$0xff]
  %1217 = vst [vmem:[%s1214] sm:$0xff] %v1216
  %s1218 = scalar_lea.vmem %s4, 248
  %s1219 = scalar_lea.vmem %s1, 248
  %v1220 = vld [vmem:[%s1219] sm:$0xff]
  %1221 = vst [vmem:[%s1218] sm:$0xff] %v1220
  %s1222 = scalar_lea.vmem %s4, 256
  %s1223 = scalar_lea.vmem %s1, 256
  %v1224 = vld [vmem:[%s1223] sm:$0xff]
  %1225 = vst [vmem:[%s1222] sm:$0xff] %v1224
  %s1226 = scalar_lea.vmem %s4, 264
  %s1227 = scalar_lea.vmem %s1, 264
  %v1228 = vld [vmem:[%s1227] sm:$0xff]
  %1229 = vst [vmem:[%s1226] sm:$0xff] %v1228
  %s1230 = scalar_lea.vmem %s4, 272
  %s1231 = scalar_lea.vmem %s1, 272
  %v1232 = vld [vmem:[%s1231] sm:$0xff]
  %1233 = vst [vmem:[%s1230] sm:$0xff] %v1232
  %s1234 = scalar_lea.vmem %s4, 280
  %s1235 = scalar_lea.vmem %s1, 280
  %v1236 = vld [vmem:[%s1235] sm:$0xff]
  %1237 = vst [vmem:[%s1234] sm:$0xff] %v1236
  %s1238 = scalar_lea.vmem %s4, 288
  %s1239 = scalar_lea.vmem %s1, 288
  %v1240 = vld [vmem:[%s1239] sm:$0xff]
  %1241 = vst [vmem:[%s1238] sm:$0xff] %v1240
  %s1242 = scalar_lea.vmem %s4, 296
  %s1243 = scalar_lea.vmem %s1, 296
  %v1244 = vld [vmem:[%s1243] sm:$0xff]
  %1245 = vst [vmem:[%s1242] sm:$0xff] %v1244
  %s1246 = scalar_lea.vmem %s4, 304
  %s1247 = scalar_lea.vmem %s1, 304
  %v1248 = vld [vmem:[%s1247] sm:$0xff]
  %1249 = vst [vmem:[%s1246] sm:$0xff] %v1248
  %s1250 = scalar_lea.vmem %s4, 312
  %s1251 = scalar_lea.vmem %s1, 312
  %v1252 = vld [vmem:[%s1251] sm:$0xff]
  %1253 = vst [vmem:[%s1250] sm:$0xff] %v1252
  %s1254 = scalar_lea.vmem %s4, 320
  %s1255 = scalar_lea.vmem %s1, 320
  %v1256 = vld [vmem:[%s1255] sm:$0xff]
  %1257 = vst [vmem:[%s1254] sm:$0xff] %v1256
  %s1258 = scalar_lea.vmem %s4, 328
  %s1259 = scalar_lea.vmem %s1, 328
  %v1260 = vld [vmem:[%s1259] sm:$0xff]
  %1261 = vst [vmem:[%s1258] sm:$0xff] %v1260
  %s1262 = scalar_lea.vmem %s4, 336
  %s1263 = scalar_lea.vmem %s1, 336
  %v1264 = vld [vmem:[%s1263] sm:$0xff]
  %1265 = vst [vmem:[%s1262] sm:$0xff] %v1264
  %s1266 = scalar_lea.vmem %s4, 344
  %s1267 = scalar_lea.vmem %s1, 344
  %v1268 = vld [vmem:[%s1267] sm:$0xff]
  %1269 = vst [vmem:[%s1266] sm:$0xff] %v1268
  %s1270 = scalar_lea.vmem %s4, 352
  %s1271 = scalar_lea.vmem %s1, 352
  %v1272 = vld [vmem:[%s1271] sm:$0xff]
  %1273 = vst [vmem:[%s1270] sm:$0xff] %v1272
  %s1274 = scalar_lea.vmem %s4, 360
  %s1275 = scalar_lea.vmem %s1, 360
  %v1276 = vld [vmem:[%s1275] sm:$0xff]
  %1277 = vst [vmem:[%s1274] sm:$0xff] %v1276
  %s1278 = scalar_lea.vmem %s4, 368
  %s1279 = scalar_lea.vmem %s1, 368
  %v1280 = vld [vmem:[%s1279] sm:$0xff]
  %1281 = vst [vmem:[%s1278] sm:$0xff] %v1280
  %s1282 = scalar_lea.vmem %s4, 376
  %s1283 = scalar_lea.vmem %s1, 376
  %v1284 = vld [vmem:[%s1283] sm:$0xff]
  %1285 = vst [vmem:[%s1282] sm:$0xff] %v1284
  %s1286 = scalar_lea.vmem %s4, 384
  %s1287 = scalar_lea.vmem %s1, 384
  %v1288 = vld [vmem:[%s1287] sm:$0xff]
  %1289 = vst [vmem:[%s1286] sm:$0xff] %v1288
  %s1290 = scalar_lea.vmem %s4, 392
  %s1291 = scalar_lea.vmem %s1, 392
  %v1292 = vld [vmem:[%s1291] sm:$0xff]
  %1293 = vst [vmem:[%s1290] sm:$0xff] %v1292
  %s1294 = scalar_lea.vmem %s4, 400
  %s1295 = scalar_lea.vmem %s1, 400
  %v1296 = vld [vmem:[%s1295] sm:$0xff]
  %1297 = vst [vmem:[%s1294] sm:$0xff] %v1296
  %s1298 = scalar_lea.vmem %s4, 408
  %s1299 = scalar_lea.vmem %s1, 408
  %v1300 = vld [vmem:[%s1299] sm:$0xff]
  %1301 = vst [vmem:[%s1298] sm:$0xff] %v1300
  %s1302 = scalar_lea.vmem %s4, 416
  %s1303 = scalar_lea.vmem %s1, 416
  %v1304 = vld [vmem:[%s1303] sm:$0xff]
  %1305 = vst [vmem:[%s1302] sm:$0xff] %v1304
  %s1306 = scalar_lea.vmem %s4, 424
  %s1307 = scalar_lea.vmem %s1, 424
  %v1308 = vld [vmem:[%s1307] sm:$0xff]
  %1309 = vst [vmem:[%s1306] sm:$0xff] %v1308
  %s1310 = scalar_lea.vmem %s4, 432
  %s1311 = scalar_lea.vmem %s1, 432
  %v1312 = vld [vmem:[%s1311] sm:$0xff]
  %1313 = vst [vmem:[%s1310] sm:$0xff] %v1312
  %s1314 = scalar_lea.vmem %s4, 440
  %s1315 = scalar_lea.vmem %s1, 440
  %v1316 = vld [vmem:[%s1315] sm:$0xff]
  %1317 = vst [vmem:[%s1314] sm:$0xff] %v1316
  %s1318 = scalar_lea.vmem %s4, 448
  %s1319 = scalar_lea.vmem %s1, 448
  %v1320 = vld [vmem:[%s1319] sm:$0xff]
  %1321 = vst [vmem:[%s1318] sm:$0xff] %v1320
  %s1322 = scalar_lea.vmem %s4, 456
  %s1323 = scalar_lea.vmem %s1, 456
  %v1324 = vld [vmem:[%s1323] sm:$0xff]
  %1325 = vst [vmem:[%s1322] sm:$0xff] %v1324
  %s1326 = scalar_lea.vmem %s4, 464
  %s1327 = scalar_lea.vmem %s1, 464
  %v1328 = vld [vmem:[%s1327] sm:$0xff]
  %1329 = vst [vmem:[%s1326] sm:$0xff] %v1328
  %s1330 = scalar_lea.vmem %s4, 472
  %s1331 = scalar_lea.vmem %s1, 472
  %v1332 = vld [vmem:[%s1331] sm:$0xff]
  %1333 = vst [vmem:[%s1330] sm:$0xff] %v1332
  %s1334 = scalar_lea.vmem %s4, 480
  %s1335 = scalar_lea.vmem %s1, 480
  %v1336 = vld [vmem:[%s1335] sm:$0xff]
  %1337 = vst [vmem:[%s1334] sm:$0xff] %v1336
  %s1338 = scalar_lea.vmem %s4, 488
  %s1339 = scalar_lea.vmem %s1, 488
  %v1340 = vld [vmem:[%s1339] sm:$0xff]
  %1341 = vst [vmem:[%s1338] sm:$0xff] %v1340
  %s1342 = scalar_lea.vmem %s4, 496
  %s1343 = scalar_lea.vmem %s1, 496
  %v1344 = vld [vmem:[%s1343] sm:$0xff]
  %1345 = vst [vmem:[%s1342] sm:$0xff] %v1344
  %s1346 = scalar_lea.vmem %s4, 504
  %s1347 = scalar_lea.vmem %s1, 504
  %v1348 = vld [vmem:[%s1347] sm:$0xff]
  %1349 = vst [vmem:[%s1346] sm:$0xff] %v1348
  %s1350 = scalar_lea.vmem %s4, 512
  %s1351 = scalar_lea.vmem %s1, 512
  %v1352 = vld [vmem:[%s1351] sm:$0xff]
  %1353 = vst [vmem:[%s1350] sm:$0xff] %v1352
  %s1354 = scalar_lea.vmem %s4, 520
  %s1355 = scalar_lea.vmem %s1, 520
  %v1356 = vld [vmem:[%s1355] sm:$0xff]
  %1357 = vst [vmem:[%s1354] sm:$0xff] %v1356
  %s1358 = scalar_lea.vmem %s4, 528
  %s1359 = scalar_lea.vmem %s1, 528
  %v1360 = vld [vmem:[%s1359] sm:$0xff]
  %1361 = vst [vmem:[%s1358] sm:$0xff] %v1360
  %s1362 = scalar_lea.vmem %s4, 536
  %s1363 = scalar_lea.vmem %s1, 536
  %v1364 = vld [vmem:[%s1363] sm:$0xff]
  %1365 = vst [vmem:[%s1362] sm:$0xff] %v1364
  %s1366 = scalar_lea.vmem %s4, 544
  %s1367 = scalar_lea.vmem %s1, 544
  %v1368 = vld [vmem:[%s1367] sm:$0xff]
  %1369 = vst [vmem:[%s1366] sm:$0xff] %v1368
  %s1370 = scalar_lea.vmem %s4, 552
  %s1371 = scalar_lea.vmem %s1, 552
  %v1372 = vld [vmem:[%s1371] sm:$0xff]
  %1373 = vst [vmem:[%s1370] sm:$0xff] %v1372
  %s1374 = scalar_lea.vmem %s4, 560
  %s1375 = scalar_lea.vmem %s1, 560
  %v1376 = vld [vmem:[%s1375] sm:$0xff]
  %1377 = vst [vmem:[%s1374] sm:$0xff] %v1376
  %s1378 = scalar_lea.vmem %s4, 568
  %s1379 = scalar_lea.vmem %s1, 568
  %v1380 = vld [vmem:[%s1379] sm:$0xff]
  %1381 = vst [vmem:[%s1378] sm:$0xff] %v1380
  %s1382 = scalar_lea.vmem %s4, 576
  %s1383 = scalar_lea.vmem %s1, 576
  %v1384 = vld [vmem:[%s1383] sm:$0xff]
  %1385 = vst [vmem:[%s1382] sm:$0xff] %v1384
  %s1386 = scalar_lea.vmem %s4, 584
  %s1387 = scalar_lea.vmem %s1, 584
  %v1388 = vld [vmem:[%s1387] sm:$0xff]
  %1389 = vst [vmem:[%s1386] sm:$0xff] %v1388
  %s1390 = scalar_lea.vmem %s4, 592
  %s1391 = scalar_lea.vmem %s1, 592
  %v1392 = vld [vmem:[%s1391] sm:$0xff]
  %1393 = vst [vmem:[%s1390] sm:$0xff] %v1392
  %s1394 = scalar_lea.vmem %s4, 600
  %s1395 = scalar_lea.vmem %s1, 600
  %v1396 = vld [vmem:[%s1395] sm:$0xff]
  %1397 = vst [vmem:[%s1394] sm:$0xff] %v1396
  %s1398 = scalar_lea.vmem %s4, 608
  %s1399 = scalar_lea.vmem %s1, 608
  %v1400 = vld [vmem:[%s1399] sm:$0xff]
  %1401 = vst [vmem:[%s1398] sm:$0xff] %v1400
  %s1402 = scalar_lea.vmem %s4, 616
  %s1403 = scalar_lea.vmem %s1, 616
  %v1404 = vld [vmem:[%s1403] sm:$0xff]
  %1405 = vst [vmem:[%s1402] sm:$0xff] %v1404
  %s1406 = scalar_lea.vmem %s4, 624
  %s1407 = scalar_lea.vmem %s1, 624
  %v1408 = vld [vmem:[%s1407] sm:$0xff]
  %1409 = vst [vmem:[%s1406] sm:$0xff] %v1408
  %s1410 = scalar_lea.vmem %s4, 632
  %s1411 = scalar_lea.vmem %s1, 632
  %v1412 = vld [vmem:[%s1411] sm:$0xff]
  %1413 = vst [vmem:[%s1410] sm:$0xff] %v1412
  %s1414 = scalar_lea.vmem %s4, 640
  %s1415 = scalar_lea.vmem %s1, 640
  %v1416 = vld [vmem:[%s1415] sm:$0xff]
  %1417 = vst [vmem:[%s1414] sm:$0xff] %v1416
  %s1418 = scalar_lea.vmem %s4, 648
  %s1419 = scalar_lea.vmem %s1, 648
  %v1420 = vld [vmem:[%s1419] sm:$0xff]
  %1421 = vst [vmem:[%s1418] sm:$0xff] %v1420
  %s1422 = scalar_lea.vmem %s4, 656
  %s1423 = scalar_lea.vmem %s1, 656
  %v1424 = vld [vmem:[%s1423] sm:$0xff]
  %1425 = vst [vmem:[%s1422] sm:$0xff] %v1424
  %s1426 = scalar_lea.vmem %s4, 664
  %s1427 = scalar_lea.vmem %s1, 664
  %v1428 = vld [vmem:[%s1427] sm:$0xff]
  %1429 = vst [vmem:[%s1426] sm:$0xff] %v1428
  %s1430 = scalar_lea.vmem %s4, 672
  %s1431 = scalar_lea.vmem %s1, 672
  %v1432 = vld [vmem:[%s1431] sm:$0xff]
  %1433 = vst [vmem:[%s1430] sm:$0xff] %v1432
  %s1434 = scalar_lea.vmem %s4, 680
  %s1435 = scalar_lea.vmem %s1, 680
  %v1436 = vld [vmem:[%s1435] sm:$0xff]
  %1437 = vst [vmem:[%s1434] sm:$0xff] %v1436
  %s1438 = scalar_lea.vmem %s4, 688
  %s1439 = scalar_lea.vmem %s1, 688
  %v1440 = vld [vmem:[%s1439] sm:$0xff]
  %1441 = vst [vmem:[%s1438] sm:$0xff] %v1440
  %s1442 = scalar_lea.vmem %s4, 696
  %s1443 = scalar_lea.vmem %s1, 696
  %v1444 = vld [vmem:[%s1443] sm:$0xff]
  %1445 = vst [vmem:[%s1442] sm:$0xff] %v1444
  %s1446 = scalar_lea.vmem %s4, 704
  %s1447 = scalar_lea.vmem %s1, 704
  %v1448 = vld [vmem:[%s1447] sm:$0xff]
  %1449 = vst [vmem:[%s1446] sm:$0xff] %v1448
  %s1450 = scalar_lea.vmem %s4, 712
  %s1451 = scalar_lea.vmem %s1, 712
  %v1452 = vld [vmem:[%s1451] sm:$0xff]
  %1453 = vst [vmem:[%s1450] sm:$0xff] %v1452
  %s1454 = scalar_lea.vmem %s4, 720
  %s1455 = scalar_lea.vmem %s1, 720
  %v1456 = vld [vmem:[%s1455] sm:$0xff]
  %1457 = vst [vmem:[%s1454] sm:$0xff] %v1456
  %s1458 = scalar_lea.vmem %s4, 728
  %s1459 = scalar_lea.vmem %s1, 728
  %v1460 = vld [vmem:[%s1459] sm:$0xff]
  %1461 = vst [vmem:[%s1458] sm:$0xff] %v1460
  %s1462 = scalar_lea.vmem %s4, 736
  %s1463 = scalar_lea.vmem %s1, 736
  %v1464 = vld [vmem:[%s1463] sm:$0xff]
  %1465 = vst [vmem:[%s1462] sm:$0xff] %v1464
  %s1466 = scalar_lea.vmem %s4, 744
  %s1467 = scalar_lea.vmem %s1, 744
  %v1468 = vld [vmem:[%s1467] sm:$0xff]
  %1469 = vst [vmem:[%s1466] sm:$0xff] %v1468
  %s1470 = scalar_lea.vmem %s4, 752
  %s1471 = scalar_lea.vmem %s1, 752
  %v1472 = vld [vmem:[%s1471] sm:$0xff]
  %1473 = vst [vmem:[%s1470] sm:$0xff] %v1472
  %s1474 = scalar_lea.vmem %s4, 760
  %s1475 = scalar_lea.vmem %s1, 760
  %v1476 = vld [vmem:[%s1475] sm:$0xff]
  %1477 = vst [vmem:[%s1474] sm:$0xff] %v1476
  %s1478 = scalar_lea.vmem %s4, 768
  %s1479 = scalar_lea.vmem %s1, 768
  %v1480 = vld [vmem:[%s1479] sm:$0xff]
  %1481 = vst [vmem:[%s1478] sm:$0xff] %v1480
  %s1482 = scalar_lea.vmem %s4, 776
  %s1483 = scalar_lea.vmem %s1, 776
  %v1484 = vld [vmem:[%s1483] sm:$0xff]
  %1485 = vst [vmem:[%s1482] sm:$0xff] %v1484
  %s1486 = scalar_lea.vmem %s4, 784
  %s1487 = scalar_lea.vmem %s1, 784
  %v1488 = vld [vmem:[%s1487] sm:$0xff]
  %1489 = vst [vmem:[%s1486] sm:$0xff] %v1488
  %s1490 = scalar_lea.vmem %s4, 792
  %s1491 = scalar_lea.vmem %s1, 792
  %v1492 = vld [vmem:[%s1491] sm:$0xff]
  %1493 = vst [vmem:[%s1490] sm:$0xff] %v1492
  %s1494 = scalar_lea.vmem %s4, 800
  %s1495 = scalar_lea.vmem %s1, 800
  %v1496 = vld [vmem:[%s1495] sm:$0xff]
  %1497 = vst [vmem:[%s1494] sm:$0xff] %v1496
  %s1498 = scalar_lea.vmem %s4, 808
  %s1499 = scalar_lea.vmem %s1, 808
  %v1500 = vld [vmem:[%s1499] sm:$0xff]
  %1501 = vst [vmem:[%s1498] sm:$0xff] %v1500
  %s1502 = scalar_lea.vmem %s4, 816
  %s1503 = scalar_lea.vmem %s1, 816
  %v1504 = vld [vmem:[%s1503] sm:$0xff]
  %1505 = vst [vmem:[%s1502] sm:$0xff] %v1504
  %s1506 = scalar_lea.vmem %s4, 824
  %s1507 = scalar_lea.vmem %s1, 824
  %v1508 = vld [vmem:[%s1507] sm:$0xff]
  %1509 = vst [vmem:[%s1506] sm:$0xff] %v1508
  %s1510 = scalar_lea.vmem %s4, 832
  %s1511 = scalar_lea.vmem %s1, 832
  %v1512 = vld [vmem:[%s1511] sm:$0xff]
  %1513 = vst [vmem:[%s1510] sm:$0xff] %v1512
  %s1514 = scalar_lea.vmem %s4, 840
  %s1515 = scalar_lea.vmem %s1, 840
  %v1516 = vld [vmem:[%s1515] sm:$0xff]
  %1517 = vst [vmem:[%s1514] sm:$0xff] %v1516
  %s1518 = scalar_lea.vmem %s4, 848
  %s1519 = scalar_lea.vmem %s1, 848
  %v1520 = vld [vmem:[%s1519] sm:$0xff]
  %1521 = vst [vmem:[%s1518] sm:$0xff] %v1520
  %s1522 = scalar_lea.vmem %s4, 856
  %s1523 = scalar_lea.vmem %s1, 856
  %v1524 = vld [vmem:[%s1523] sm:$0xff]
  %1525 = vst [vmem:[%s1522] sm:$0xff] %v1524
  %s1526 = scalar_lea.vmem %s4, 864
  %s1527 = scalar_lea.vmem %s1, 864
  %v1528 = vld [vmem:[%s1527] sm:$0xff]
  %1529 = vst [vmem:[%s1526] sm:$0xff] %v1528
  %s1530 = scalar_lea.vmem %s4, 872
  %s1531 = scalar_lea.vmem %s1, 872
  %v1532 = vld [vmem:[%s1531] sm:$0xff]
  %1533 = vst [vmem:[%s1530] sm:$0xff] %v1532
  %s1534 = scalar_lea.vmem %s4, 880
  %s1535 = scalar_lea.vmem %s1, 880
  %v1536 = vld [vmem:[%s1535] sm:$0xff]
  %1537 = vst [vmem:[%s1534] sm:$0xff] %v1536
  %s1538 = scalar_lea.vmem %s4, 888
  %s1539 = scalar_lea.vmem %s1, 888
  %v1540 = vld [vmem:[%s1539] sm:$0xff]
  %1541 = vst [vmem:[%s1538] sm:$0xff] %v1540
  %s1542 = scalar_lea.vmem %s4, 896
  %s1543 = scalar_lea.vmem %s1, 896
  %v1544 = vld [vmem:[%s1543] sm:$0xff]
  %1545 = vst [vmem:[%s1542] sm:$0xff] %v1544
  %s1546 = scalar_lea.vmem %s4, 904
  %s1547 = scalar_lea.vmem %s1, 904
  %v1548 = vld [vmem:[%s1547] sm:$0xff]
  %1549 = vst [vmem:[%s1546] sm:$0xff] %v1548
  %s1550 = scalar_lea.vmem %s4, 912
  %s1551 = scalar_lea.vmem %s1, 912
  %v1552 = vld [vmem:[%s1551] sm:$0xff]
  %1553 = vst [vmem:[%s1550] sm:$0xff] %v1552
  %s1554 = scalar_lea.vmem %s4, 920
  %s1555 = scalar_lea.vmem %s1, 920
  %v1556 = vld [vmem:[%s1555] sm:$0xff]
  %1557 = vst [vmem:[%s1554] sm:$0xff] %v1556
  %s1558 = scalar_lea.vmem %s4, 928
  %s1559 = scalar_lea.vmem %s1, 928
  %v1560 = vld [vmem:[%s1559] sm:$0xff]
  %1561 = vst [vmem:[%s1558] sm:$0xff] %v1560
  %s1562 = scalar_lea.vmem %s4, 936
  %s1563 = scalar_lea.vmem %s1, 936
  %v1564 = vld [vmem:[%s1563] sm:$0xff]
  %1565 = vst [vmem:[%s1562] sm:$0xff] %v1564
  %s1566 = scalar_lea.vmem %s4, 944
  %s1567 = scalar_lea.vmem %s1, 944
  %v1568 = vld [vmem:[%s1567] sm:$0xff]
  %1569 = vst [vmem:[%s1566] sm:$0xff] %v1568
  %s1570 = scalar_lea.vmem %s4, 952
  %s1571 = scalar_lea.vmem %s1, 952
  %v1572 = vld [vmem:[%s1571] sm:$0xff]
  %1573 = vst [vmem:[%s1570] sm:$0xff] %v1572
  %s1574 = scalar_lea.vmem %s4, 960
  %s1575 = scalar_lea.vmem %s1, 960
  %v1576 = vld [vmem:[%s1575] sm:$0xff]
  %1577 = vst [vmem:[%s1574] sm:$0xff] %v1576
  %s1578 = scalar_lea.vmem %s4, 968
  %s1579 = scalar_lea.vmem %s1, 968
  %v1580 = vld [vmem:[%s1579] sm:$0xff]
  %1581 = vst [vmem:[%s1578] sm:$0xff] %v1580
  %s1582 = scalar_lea.vmem %s4, 976
  %s1583 = scalar_lea.vmem %s1, 976
  %v1584 = vld [vmem:[%s1583] sm:$0xff]
  %1585 = vst [vmem:[%s1582] sm:$0xff] %v1584
  %s1586 = scalar_lea.vmem %s4, 984
  %s1587 = scalar_lea.vmem %s1, 984
  %v1588 = vld [vmem:[%s1587] sm:$0xff]
  %1589 = vst [vmem:[%s1586] sm:$0xff] %v1588
  %s1590 = scalar_lea.vmem %s4, 992
  %s1591 = scalar_lea.vmem %s1, 992
  %v1592 = vld [vmem:[%s1591] sm:$0xff]
  %1593 = vst [vmem:[%s1590] sm:$0xff] %v1592
  %s1594 = scalar_lea.vmem %s4, 1000
  %s1595 = scalar_lea.vmem %s1, 1000
  %v1596 = vld [vmem:[%s1595] sm:$0xff]
  %1597 = vst [vmem:[%s1594] sm:$0xff] %v1596
  %s1598 = scalar_lea.vmem %s4, 1008
  %s1599 = scalar_lea.vmem %s1, 1008
  %v1600 = vld [vmem:[%s1599] sm:$0xff]
  %1601 = vst [vmem:[%s1598] sm:$0xff] %v1600
  %s1602 = scalar_lea.vmem %s4, 1016
  %s1603 = scalar_lea.vmem %s1, 1016
  %v1604 = vld [vmem:[%s1603] sm:$0xff]
  %1605 = vst [vmem:[%s1602] sm:$0xff] %v1604
  %s1606 = scalar_lea.vmem %s4, 1024
  %s1607 = scalar_lea.vmem %s1, 1024
  %v1608 = vld [vmem:[%s1607] sm:$0xff]
  %1609 = vst [vmem:[%s1606] sm:$0xff] %v1608
  %s1610 = scalar_lea.vmem %s4, 1032
  %s1611 = scalar_lea.vmem %s1, 1032
  %v1612 = vld [vmem:[%s1611] sm:$0xff]
  %1613 = vst [vmem:[%s1610] sm:$0xff] %v1612
  %s1614 = scalar_lea.vmem %s4, 1040
  %s1615 = scalar_lea.vmem %s1, 1040
  %v1616 = vld [vmem:[%s1615] sm:$0xff]
  %1617 = vst [vmem:[%s1614] sm:$0xff] %v1616
  %s1618 = scalar_lea.vmem %s4, 1048
  %s1619 = scalar_lea.vmem %s1, 1048
  %v1620 = vld [vmem:[%s1619] sm:$0xff]
  %1621 = vst [vmem:[%s1618] sm:$0xff] %v1620
  %s1622 = scalar_lea.vmem %s4, 1056
  %s1623 = scalar_lea.vmem %s1, 1056
  %v1624 = vld [vmem:[%s1623] sm:$0xff]
  %1625 = vst [vmem:[%s1622] sm:$0xff] %v1624
  %s1626 = scalar_lea.vmem %s4, 1064
  %s1627 = scalar_lea.vmem %s1, 1064
  %v1628 = vld [vmem:[%s1627] sm:$0xff]
  %1629 = vst [vmem:[%s1626] sm:$0xff] %v1628
  %s1630 = scalar_lea.vmem %s4, 1072
  %s1631 = scalar_lea.vmem %s1, 1072
  %v1632 = vld [vmem:[%s1631] sm:$0xff]
  %1633 = vst [vmem:[%s1630] sm:$0xff] %v1632
  %s1634 = scalar_lea.vmem %s4, 1080
  %s1635 = scalar_lea.vmem %s1, 1080
  %v1636 = vld [vmem:[%s1635] sm:$0xff]
  %1637 = vst [vmem:[%s1634] sm:$0xff] %v1636
  %s1638 = scalar_lea.vmem %s4, 1088
  %s1639 = scalar_lea.vmem %s1, 1088
  %v1640 = vld [vmem:[%s1639] sm:$0xff]
  %1641 = vst [vmem:[%s1638] sm:$0xff] %v1640
  %s1642 = scalar_lea.vmem %s4, 1096
  %s1643 = scalar_lea.vmem %s1, 1096
  %v1644 = vld [vmem:[%s1643] sm:$0xff]
  %1645 = vst [vmem:[%s1642] sm:$0xff] %v1644
  %s1646 = scalar_lea.vmem %s4, 1104
  %s1647 = scalar_lea.vmem %s1, 1104
  %v1648 = vld [vmem:[%s1647] sm:$0xff]
  %1649 = vst [vmem:[%s1646] sm:$0xff] %v1648
  %s1650 = scalar_lea.vmem %s4, 1112
  %s1651 = scalar_lea.vmem %s1, 1112
  %v1652 = vld [vmem:[%s1651] sm:$0xff]
  %1653 = vst [vmem:[%s1650] sm:$0xff] %v1652
  %s1654 = scalar_lea.vmem %s4, 1120
  %s1655 = scalar_lea.vmem %s1, 1120
  %v1656 = vld [vmem:[%s1655] sm:$0xff]
  %1657 = vst [vmem:[%s1654] sm:$0xff] %v1656
  %s1658 = scalar_lea.vmem %s4, 1128
  %s1659 = scalar_lea.vmem %s1, 1128
  %v1660 = vld [vmem:[%s1659] sm:$0xff]
  %1661 = vst [vmem:[%s1658] sm:$0xff] %v1660
  %s1662 = scalar_lea.vmem %s4, 1136
  %s1663 = scalar_lea.vmem %s1, 1136
  %v1664 = vld [vmem:[%s1663] sm:$0xff]
  %1665 = vst [vmem:[%s1662] sm:$0xff] %v1664
  %s1666 = scalar_lea.vmem %s4, 1144
  %s1667 = scalar_lea.vmem %s1, 1144
  %v1668 = vld [vmem:[%s1667] sm:$0xff]
  %1669 = vst [vmem:[%s1666] sm:$0xff] %v1668
  %s1670 = scalar_lea.vmem %s4, 1152
  %s1671 = scalar_lea.vmem %s1, 1152
  %v1672 = vld [vmem:[%s1671] sm:$0xff]
  %1673 = vst [vmem:[%s1670] sm:$0xff] %v1672
  %s1674 = scalar_lea.vmem %s4, 1160
  %s1675 = scalar_lea.vmem %s1, 1160
  %v1676 = vld [vmem:[%s1675] sm:$0xff]
  %1677 = vst [vmem:[%s1674] sm:$0xff] %v1676
  %s1678 = scalar_lea.vmem %s4, 1168
  %s1679 = scalar_lea.vmem %s1, 1168
  %v1680 = vld [vmem:[%s1679] sm:$0xff]
  %1681 = vst [vmem:[%s1678] sm:$0xff] %v1680
  %s1682 = scalar_lea.vmem %s4, 1176
  %s1683 = scalar_lea.vmem %s1, 1176
  %v1684 = vld [vmem:[%s1683] sm:$0xff]
  %1685 = vst [vmem:[%s1682] sm:$0xff] %v1684
  %s1686 = scalar_lea.vmem %s4, 1184
  %s1687 = scalar_lea.vmem %s1, 1184
  %v1688 = vld [vmem:[%s1687] sm:$0xff]
  %1689 = vst [vmem:[%s1686] sm:$0xff] %v1688
  %s1690 = scalar_lea.vmem %s4, 1192
  %s1691 = scalar_lea.vmem %s1, 1192
  %v1692 = vld [vmem:[%s1691] sm:$0xff]
  %1693 = vst [vmem:[%s1690] sm:$0xff] %v1692
  %s1694 = scalar_lea.vmem %s4, 1200
  %s1695 = scalar_lea.vmem %s1, 1200
  %v1696 = vld [vmem:[%s1695] sm:$0xff]
  %1697 = vst [vmem:[%s1694] sm:$0xff] %v1696
  %s1698 = scalar_lea.vmem %s4, 1208
  %s1699 = scalar_lea.vmem %s1, 1208
  %v1700 = vld [vmem:[%s1699] sm:$0xff]
  %1701 = vst [vmem:[%s1698] sm:$0xff] %v1700
  %s1702 = scalar_lea.vmem %s4, 1216
  %s1703 = scalar_lea.vmem %s1, 1216
  %v1704 = vld [vmem:[%s1703] sm:$0xff]
  %1705 = vst [vmem:[%s1702] sm:$0xff] %v1704
  %s1706 = scalar_lea.vmem %s4, 1224
  %s1707 = scalar_lea.vmem %s1, 1224
  %v1708 = vld [vmem:[%s1707] sm:$0xff]
  %1709 = vst [vmem:[%s1706] sm:$0xff] %v1708
  %s1710 = scalar_lea.vmem %s4, 1232
  %s1711 = scalar_lea.vmem %s1, 1232
  %v1712 = vld [vmem:[%s1711] sm:$0xff]
  %1713 = vst [vmem:[%s1710] sm:$0xff] %v1712
  %s1714 = scalar_lea.vmem %s4, 1240
  %s1715 = scalar_lea.vmem %s1, 1240
  %v1716 = vld [vmem:[%s1715] sm:$0xff]
  %1717 = vst [vmem:[%s1714] sm:$0xff] %v1716
  %s1718 = scalar_lea.vmem %s4, 1248
  %s1719 = scalar_lea.vmem %s1, 1248
  %v1720 = vld [vmem:[%s1719] sm:$0xff]
  %1721 = vst [vmem:[%s1718] sm:$0xff] %v1720
  %s1722 = scalar_lea.vmem %s4, 1256
  %s1723 = scalar_lea.vmem %s1, 1256
  %v1724 = vld [vmem:[%s1723] sm:$0xff]
  %1725 = vst [vmem:[%s1722] sm:$0xff] %v1724
  %s1726 = scalar_lea.vmem %s4, 1264
  %s1727 = scalar_lea.vmem %s1, 1264
  %v1728 = vld [vmem:[%s1727] sm:$0xff]
  %1729 = vst [vmem:[%s1726] sm:$0xff] %v1728
  %s1730 = scalar_lea.vmem %s4, 1272
  %s1731 = scalar_lea.vmem %s1, 1272
  %v1732 = vld [vmem:[%s1731] sm:$0xff]
  %1733 = vst [vmem:[%s1730] sm:$0xff] %v1732
  %s1734 = scalar_lea.vmem %s4, 1280
  %s1735 = scalar_lea.vmem %s1, 1280
  %v1736 = vld [vmem:[%s1735] sm:$0xff]
  %1737 = vst [vmem:[%s1734] sm:$0xff] %v1736
  %s1738 = scalar_lea.vmem %s4, 1288
  %s1739 = scalar_lea.vmem %s1, 1288
  %v1740 = vld [vmem:[%s1739] sm:$0xff]
  %1741 = vst [vmem:[%s1738] sm:$0xff] %v1740
  %s1742 = scalar_lea.vmem %s4, 1296
  %s1743 = scalar_lea.vmem %s1, 1296
  %v1744 = vld [vmem:[%s1743] sm:$0xff]
  %1745 = vst [vmem:[%s1742] sm:$0xff] %v1744
  %s1746 = scalar_lea.vmem %s4, 1304
  %s1747 = scalar_lea.vmem %s1, 1304
  %v1748 = vld [vmem:[%s1747] sm:$0xff]
  %1749 = vst [vmem:[%s1746] sm:$0xff] %v1748
  %s1750 = scalar_lea.vmem %s4, 1312
  %s1751 = scalar_lea.vmem %s1, 1312
  %v1752 = vld [vmem:[%s1751] sm:$0xff]
  %1753 = vst [vmem:[%s1750] sm:$0xff] %v1752
  %s1754 = scalar_lea.vmem %s4, 1320
  %s1755 = scalar_lea.vmem %s1, 1320
  %v1756 = vld [vmem:[%s1755] sm:$0xff]
  %1757 = vst [vmem:[%s1754] sm:$0xff] %v1756
  %s1758 = scalar_lea.vmem %s4, 1328
  %s1759 = scalar_lea.vmem %s1, 1328
  %v1760 = vld [vmem:[%s1759] sm:$0xff]
  %1761 = vst [vmem:[%s1758] sm:$0xff] %v1760
  %s1762 = scalar_lea.vmem %s4, 1336
  %s1763 = scalar_lea.vmem %s1, 1336
  %v1764 = vld [vmem:[%s1763] sm:$0xff]
  %1765 = vst [vmem:[%s1762] sm:$0xff] %v1764
  %s1766 = scalar_lea.vmem %s4, 1344
  %s1767 = scalar_lea.vmem %s1, 1344
  %v1768 = vld [vmem:[%s1767] sm:$0xff]
  %1769 = vst [vmem:[%s1766] sm:$0xff] %v1768
  %s1770 = scalar_lea.vmem %s4, 1352
  %s1771 = scalar_lea.vmem %s1, 1352
  %v1772 = vld [vmem:[%s1771] sm:$0xff]
  %1773 = vst [vmem:[%s1770] sm:$0xff] %v1772
  %s1774 = scalar_lea.vmem %s4, 1360
  %s1775 = scalar_lea.vmem %s1, 1360
  %v1776 = vld [vmem:[%s1775] sm:$0xff]
  %1777 = vst [vmem:[%s1774] sm:$0xff] %v1776
  %s1778 = scalar_lea.vmem %s4, 1368
  %s1779 = scalar_lea.vmem %s1, 1368
  %v1780 = vld [vmem:[%s1779] sm:$0xff]
  %1781 = vst [vmem:[%s1778] sm:$0xff] %v1780
  %s1782 = scalar_lea.vmem %s4, 1376
  %s1783 = scalar_lea.vmem %s1, 1376
  %v1784 = vld [vmem:[%s1783] sm:$0xff]
  %1785 = vst [vmem:[%s1782] sm:$0xff] %v1784
  %s1786 = scalar_lea.vmem %s4, 1384
  %s1787 = scalar_lea.vmem %s1, 1384
  %v1788 = vld [vmem:[%s1787] sm:$0xff]
  %1789 = vst [vmem:[%s1786] sm:$0xff] %v1788
  %s1790 = scalar_lea.vmem %s4, 1392
  %s1791 = scalar_lea.vmem %s1, 1392
  %v1792 = vld [vmem:[%s1791] sm:$0xff]
  %1793 = vst [vmem:[%s1790] sm:$0xff] %v1792
  %s1794 = scalar_lea.vmem %s4, 1400
  %s1795 = scalar_lea.vmem %s1, 1400
  %v1796 = vld [vmem:[%s1795] sm:$0xff]
  %1797 = vst [vmem:[%s1794] sm:$0xff] %v1796
  %s1798 = scalar_lea.vmem %s4, 1408
  %s1799 = scalar_lea.vmem %s1, 1408
  %v1800 = vld [vmem:[%s1799] sm:$0xff]
  %1801 = vst [vmem:[%s1798] sm:$0xff] %v1800
  %s1802 = scalar_lea.vmem %s4, 1416
  %s1803 = scalar_lea.vmem %s1, 1416
  %v1804 = vld [vmem:[%s1803] sm:$0xff]
  %1805 = vst [vmem:[%s1802] sm:$0xff] %v1804
  %s1806 = scalar_lea.vmem %s4, 1424
  %s1807 = scalar_lea.vmem %s1, 1424
  %v1808 = vld [vmem:[%s1807] sm:$0xff]
  %1809 = vst [vmem:[%s1806] sm:$0xff] %v1808
  %s1810 = scalar_lea.vmem %s4, 1432
  %s1811 = scalar_lea.vmem %s1, 1432
  %v1812 = vld [vmem:[%s1811] sm:$0xff]
  %1813 = vst [vmem:[%s1810] sm:$0xff] %v1812
  %s1814 = scalar_lea.vmem %s4, 1440
  %s1815 = scalar_lea.vmem %s1, 1440
  %v1816 = vld [vmem:[%s1815] sm:$0xff]
  %1817 = vst [vmem:[%s1814] sm:$0xff] %v1816
  %s1818 = scalar_lea.vmem %s4, 1448
  %s1819 = scalar_lea.vmem %s1, 1448
  %v1820 = vld [vmem:[%s1819] sm:$0xff]
  %1821 = vst [vmem:[%s1818] sm:$0xff] %v1820
  %s1822 = scalar_lea.vmem %s4, 1456
  %s1823 = scalar_lea.vmem %s1, 1456
  %v1824 = vld [vmem:[%s1823] sm:$0xff]
  %1825 = vst [vmem:[%s1822] sm:$0xff] %v1824
  %s1826 = scalar_lea.vmem %s4, 1464
  %s1827 = scalar_lea.vmem %s1, 1464
  %v1828 = vld [vmem:[%s1827] sm:$0xff]
  %1829 = vst [vmem:[%s1826] sm:$0xff] %v1828
  %s1830 = scalar_lea.vmem %s4, 1472
  %s1831 = scalar_lea.vmem %s1, 1472
  %v1832 = vld [vmem:[%s1831] sm:$0xff]
  %1833 = vst [vmem:[%s1830] sm:$0xff] %v1832
  %s1834 = scalar_lea.vmem %s4, 1480
  %s1835 = scalar_lea.vmem %s1, 1480
  %v1836 = vld [vmem:[%s1835] sm:$0xff]
  %1837 = vst [vmem:[%s1834] sm:$0xff] %v1836
  %s1838 = scalar_lea.vmem %s4, 1488
  %s1839 = scalar_lea.vmem %s1, 1488
  %v1840 = vld [vmem:[%s1839] sm:$0xff]
  %1841 = vst [vmem:[%s1838] sm:$0xff] %v1840
  %s1842 = scalar_lea.vmem %s4, 1496
  %s1843 = scalar_lea.vmem %s1, 1496
  %v1844 = vld [vmem:[%s1843] sm:$0xff]
  %1845 = vst [vmem:[%s1842] sm:$0xff] %v1844
  %s1846 = scalar_lea.vmem %s4, 1504
  %s1847 = scalar_lea.vmem %s1, 1504
  %v1848 = vld [vmem:[%s1847] sm:$0xff]
  %1849 = vst [vmem:[%s1846] sm:$0xff] %v1848
  %s1850 = scalar_lea.vmem %s4, 1512
  %s1851 = scalar_lea.vmem %s1, 1512
  %v1852 = vld [vmem:[%s1851] sm:$0xff]
  %1853 = vst [vmem:[%s1850] sm:$0xff] %v1852
  %s1854 = scalar_lea.vmem %s4, 1520
  %s1855 = scalar_lea.vmem %s1, 1520
  %v1856 = vld [vmem:[%s1855] sm:$0xff]
  %1857 = vst [vmem:[%s1854] sm:$0xff] %v1856
  %s1858 = scalar_lea.vmem %s4, 1528
  %s1859 = scalar_lea.vmem %s1, 1528
  %v1860 = vld [vmem:[%s1859] sm:$0xff]
  %1861 = vst [vmem:[%s1858] sm:$0xff] %v1860
  %s1862 = scalar_lea.vmem %s4, 1536
  %s1863 = scalar_lea.vmem %s1, 1536
  %v1864 = vld [vmem:[%s1863] sm:$0xff]
  %1865 = vst [vmem:[%s1862] sm:$0xff] %v1864
  %s1866 = scalar_lea.vmem %s4, 1544
  %s1867 = scalar_lea.vmem %s1, 1544
  %v1868 = vld [vmem:[%s1867] sm:$0xff]
  %1869 = vst [vmem:[%s1866] sm:$0xff] %v1868
  %s1870 = scalar_lea.vmem %s4, 1552
  %s1871 = scalar_lea.vmem %s1, 1552
  %v1872 = vld [vmem:[%s1871] sm:$0xff]
  %1873 = vst [vmem:[%s1870] sm:$0xff] %v1872
  %s1874 = scalar_lea.vmem %s4, 1560
  %s1875 = scalar_lea.vmem %s1, 1560
  %v1876 = vld [vmem:[%s1875] sm:$0xff]
  %1877 = vst [vmem:[%s1874] sm:$0xff] %v1876
  %s1878 = scalar_lea.vmem %s4, 1568
  %s1879 = scalar_lea.vmem %s1, 1568
  %v1880 = vld [vmem:[%s1879] sm:$0xff]
  %1881 = vst [vmem:[%s1878] sm:$0xff] %v1880
  %s1882 = scalar_lea.vmem %s4, 1576
  %s1883 = scalar_lea.vmem %s1, 1576
  %v1884 = vld [vmem:[%s1883] sm:$0xff]
  %1885 = vst [vmem:[%s1882] sm:$0xff] %v1884
  %s1886 = scalar_lea.vmem %s4, 1584
  %s1887 = scalar_lea.vmem %s1, 1584
  %v1888 = vld [vmem:[%s1887] sm:$0xff]
  %1889 = vst [vmem:[%s1886] sm:$0xff] %v1888
  %s1890 = scalar_lea.vmem %s4, 1592
  %s1891 = scalar_lea.vmem %s1, 1592
  %v1892 = vld [vmem:[%s1891] sm:$0xff]
  %1893 = vst [vmem:[%s1890] sm:$0xff] %v1892
  %s1894 = scalar_lea.vmem %s4, 1600
  %s1895 = scalar_lea.vmem %s1, 1600
  %v1896 = vld [vmem:[%s1895] sm:$0xff]
  %1897 = vst [vmem:[%s1894] sm:$0xff] %v1896
  %s1898 = scalar_lea.vmem %s4, 1608
  %s1899 = scalar_lea.vmem %s1, 1608
  %v1900 = vld [vmem:[%s1899] sm:$0xff]
  %1901 = vst [vmem:[%s1898] sm:$0xff] %v1900
  %s1902 = scalar_lea.vmem %s4, 1616
  %s1903 = scalar_lea.vmem %s1, 1616
  %v1904 = vld [vmem:[%s1903] sm:$0xff]
  %1905 = vst [vmem:[%s1902] sm:$0xff] %v1904
  %s1906 = scalar_lea.vmem %s4, 1624
  %s1907 = scalar_lea.vmem %s1, 1624
  %v1908 = vld [vmem:[%s1907] sm:$0xff]
  %1909 = vst [vmem:[%s1906] sm:$0xff] %v1908
  %s1910 = scalar_lea.vmem %s4, 1632
  %s1911 = scalar_lea.vmem %s1, 1632
  %v1912 = vld [vmem:[%s1911] sm:$0xff]
  %1913 = vst [vmem:[%s1910] sm:$0xff] %v1912
  %s1914 = scalar_lea.vmem %s4, 1640
  %s1915 = scalar_lea.vmem %s1, 1640
  %v1916 = vld [vmem:[%s1915] sm:$0xff]
  %1917 = vst [vmem:[%s1914] sm:$0xff] %v1916
  %s1918 = scalar_lea.vmem %s4, 1648
  %s1919 = scalar_lea.vmem %s1, 1648
  %v1920 = vld [vmem:[%s1919] sm:$0xff]
  %1921 = vst [vmem:[%s1918] sm:$0xff] %v1920
  %s1922 = scalar_lea.vmem %s4, 1656
  %s1923 = scalar_lea.vmem %s1, 1656
  %v1924 = vld [vmem:[%s1923] sm:$0xff]
  %1925 = vst [vmem:[%s1922] sm:$0xff] %v1924
  %s1926 = scalar_lea.vmem %s4, 1664
  %s1927 = scalar_lea.vmem %s1, 1664
  %v1928 = vld [vmem:[%s1927] sm:$0xff]
  %1929 = vst [vmem:[%s1926] sm:$0xff] %v1928
  %s1930 = scalar_lea.vmem %s4, 1672
  %s1931 = scalar_lea.vmem %s1, 1672
  %v1932 = vld [vmem:[%s1931] sm:$0xff]
  %1933 = vst [vmem:[%s1930] sm:$0xff] %v1932
  %s1934 = scalar_lea.vmem %s4, 1680
  %s1935 = scalar_lea.vmem %s1, 1680
  %v1936 = vld [vmem:[%s1935] sm:$0xff]
  %1937 = vst [vmem:[%s1934] sm:$0xff] %v1936
  %s1938 = scalar_lea.vmem %s4, 1688
  %s1939 = scalar_lea.vmem %s1, 1688
  %v1940 = vld [vmem:[%s1939] sm:$0xff]
  %1941 = vst [vmem:[%s1938] sm:$0xff] %v1940
  %s1942 = scalar_lea.vmem %s4, 1696
  %s1943 = scalar_lea.vmem %s1, 1696
  %v1944 = vld [vmem:[%s1943] sm:$0xff]
  %1945 = vst [vmem:[%s1942] sm:$0xff] %v1944
  %s1946 = scalar_lea.vmem %s4, 1704
  %s1947 = scalar_lea.vmem %s1, 1704
  %v1948 = vld [vmem:[%s1947] sm:$0xff]
  %1949 = vst [vmem:[%s1946] sm:$0xff] %v1948
  %s1950 = scalar_lea.vmem %s4, 1712
  %s1951 = scalar_lea.vmem %s1, 1712
  %v1952 = vld [vmem:[%s1951] sm:$0xff]
  %1953 = vst [vmem:[%s1950] sm:$0xff] %v1952
  %s1954 = scalar_lea.vmem %s4, 1720
  %s1955 = scalar_lea.vmem %s1, 1720
  %v1956 = vld [vmem:[%s1955] sm:$0xff]
  %1957 = vst [vmem:[%s1954] sm:$0xff] %v1956
  %s1958 = scalar_lea.vmem %s4, 1728
  %s1959 = scalar_lea.vmem %s1, 1728
  %v1960 = vld [vmem:[%s1959] sm:$0xff]
  %1961 = vst [vmem:[%s1958] sm:$0xff] %v1960
  %s1962 = scalar_lea.vmem %s4, 1736
  %s1963 = scalar_lea.vmem %s1, 1736
  %v1964 = vld [vmem:[%s1963] sm:$0xff]
  %1965 = vst [vmem:[%s1962] sm:$0xff] %v1964
  %s1966 = scalar_lea.vmem %s4, 1744
  %s1967 = scalar_lea.vmem %s1, 1744
  %v1968 = vld [vmem:[%s1967] sm:$0xff]
  %1969 = vst [vmem:[%s1966] sm:$0xff] %v1968
  %s1970 = scalar_lea.vmem %s4, 1752
  %s1971 = scalar_lea.vmem %s1, 1752
  %v1972 = vld [vmem:[%s1971] sm:$0xff]
  %1973 = vst [vmem:[%s1970] sm:$0xff] %v1972
  %s1974 = scalar_lea.vmem %s4, 1760
  %s1975 = scalar_lea.vmem %s1, 1760
  %v1976 = vld [vmem:[%s1975] sm:$0xff]
  %1977 = vst [vmem:[%s1974] sm:$0xff] %v1976
  %s1978 = scalar_lea.vmem %s4, 1768
  %s1979 = scalar_lea.vmem %s1, 1768
  %v1980 = vld [vmem:[%s1979] sm:$0xff]
  %1981 = vst [vmem:[%s1978] sm:$0xff] %v1980
  %s1982 = scalar_lea.vmem %s4, 1776
  %s1983 = scalar_lea.vmem %s1, 1776
  %v1984 = vld [vmem:[%s1983] sm:$0xff]
  %1985 = vst [vmem:[%s1982] sm:$0xff] %v1984
  %s1986 = scalar_lea.vmem %s4, 1784
  %s1987 = scalar_lea.vmem %s1, 1784
  %v1988 = vld [vmem:[%s1987] sm:$0xff]
  %1989 = vst [vmem:[%s1986] sm:$0xff] %v1988
  %s1990 = scalar_lea.vmem %s4, 1792
  %s1991 = scalar_lea.vmem %s1, 1792
  %v1992 = vld [vmem:[%s1991] sm:$0xff]
  %1993 = vst [vmem:[%s1990] sm:$0xff] %v1992
  %s1994 = scalar_lea.vmem %s4, 1800
  %s1995 = scalar_lea.vmem %s1, 1800
  %v1996 = vld [vmem:[%s1995] sm:$0xff]
  %1997 = vst [vmem:[%s1994] sm:$0xff] %v1996
  %s1998 = scalar_lea.vmem %s4, 1808
  %s1999 = scalar_lea.vmem %s1, 1808
  %v2000 = vld [vmem:[%s1999] sm:$0xff]
  %2001 = vst [vmem:[%s1998] sm:$0xff] %v2000
  %s2002 = scalar_lea.vmem %s4, 1816
  %s2003 = scalar_lea.vmem %s1, 1816
  %v2004 = vld [vmem:[%s2003] sm:$0xff]
  %2005 = vst [vmem:[%s2002] sm:$0xff] %v2004
  %s2006 = scalar_lea.vmem %s4, 1824
  %s2007 = scalar_lea.vmem %s1, 1824
  %v2008 = vld [vmem:[%s2007] sm:$0xff]
  %2009 = vst [vmem:[%s2006] sm:$0xff] %v2008
  %s2010 = scalar_lea.vmem %s4, 1832
  %s2011 = scalar_lea.vmem %s1, 1832
  %v2012 = vld [vmem:[%s2011] sm:$0xff]
  %2013 = vst [vmem:[%s2010] sm:$0xff] %v2012
  %s2014 = scalar_lea.vmem %s4, 1840
  %s2015 = scalar_lea.vmem %s1, 1840
  %v2016 = vld [vmem:[%s2015] sm:$0xff]
  %2017 = vst [vmem:[%s2014] sm:$0xff] %v2016
  %s2018 = scalar_lea.vmem %s4, 1848
  %s2019 = scalar_lea.vmem %s1, 1848
  %v2020 = vld [vmem:[%s2019] sm:$0xff]
  %2021 = vst [vmem:[%s2018] sm:$0xff] %v2020
  %s2022 = scalar_lea.vmem %s4, 1856
  %s2023 = scalar_lea.vmem %s1, 1856
  %v2024 = vld [vmem:[%s2023] sm:$0xff]
  %2025 = vst [vmem:[%s2022] sm:$0xff] %v2024
  %s2026 = scalar_lea.vmem %s4, 1864
  %s2027 = scalar_lea.vmem %s1, 1864
  %v2028 = vld [vmem:[%s2027] sm:$0xff]
  %2029 = vst [vmem:[%s2026] sm:$0xff] %v2028
  %s2030 = scalar_lea.vmem %s4, 1872
  %s2031 = scalar_lea.vmem %s1, 1872
  %v2032 = vld [vmem:[%s2031] sm:$0xff]
  %2033 = vst [vmem:[%s2030] sm:$0xff] %v2032
  %s2034 = scalar_lea.vmem %s4, 1880
  %s2035 = scalar_lea.vmem %s1, 1880
  %v2036 = vld [vmem:[%s2035] sm:$0xff]
  %2037 = vst [vmem:[%s2034] sm:$0xff] %v2036
  %s2038 = scalar_lea.vmem %s4, 1888
  %s2039 = scalar_lea.vmem %s1, 1888
  %v2040 = vld [vmem:[%s2039] sm:$0xff]
  %2041 = vst [vmem:[%s2038] sm:$0xff] %v2040
  %s2042 = scalar_lea.vmem %s4, 1896
  %s2043 = scalar_lea.vmem %s1, 1896
  %v2044 = vld [vmem:[%s2043] sm:$0xff]
  %2045 = vst [vmem:[%s2042] sm:$0xff] %v2044
  %s2046 = scalar_lea.vmem %s4, 1904
  %s2047 = scalar_lea.vmem %s1, 1904
  %v2048 = vld [vmem:[%s2047] sm:$0xff]
  %2049 = vst [vmem:[%s2046] sm:$0xff] %v2048
  %s2050 = scalar_lea.vmem %s4, 1912
  %s2051 = scalar_lea.vmem %s1, 1912
  %v2052 = vld [vmem:[%s2051] sm:$0xff]
  %2053 = vst [vmem:[%s2050] sm:$0xff] %v2052
  %s2054 = scalar_lea.vmem %s4, 1920
  %s2055 = scalar_lea.vmem %s1, 1920
  %v2056 = vld [vmem:[%s2055] sm:$0xff]
  %2057 = vst [vmem:[%s2054] sm:$0xff] %v2056
  %s2058 = scalar_lea.vmem %s4, 1928
  %s2059 = scalar_lea.vmem %s1, 1928
  %v2060 = vld [vmem:[%s2059] sm:$0xff]
  %2061 = vst [vmem:[%s2058] sm:$0xff] %v2060
  %s2062 = scalar_lea.vmem %s4, 1936
  %s2063 = scalar_lea.vmem %s1, 1936
  %v2064 = vld [vmem:[%s2063] sm:$0xff]
  %2065 = vst [vmem:[%s2062] sm:$0xff] %v2064
  %s2066 = scalar_lea.vmem %s4, 1944
  %s2067 = scalar_lea.vmem %s1, 1944
  %v2068 = vld [vmem:[%s2067] sm:$0xff]
  %2069 = vst [vmem:[%s2066] sm:$0xff] %v2068
  %s2070 = scalar_lea.vmem %s4, 1952
  %s2071 = scalar_lea.vmem %s1, 1952
  %v2072 = vld [vmem:[%s2071] sm:$0xff]
  %2073 = vst [vmem:[%s2070] sm:$0xff] %v2072
  %s2074 = scalar_lea.vmem %s4, 1960
  %s2075 = scalar_lea.vmem %s1, 1960
  %v2076 = vld [vmem:[%s2075] sm:$0xff]
  %2077 = vst [vmem:[%s2074] sm:$0xff] %v2076
  %s2078 = scalar_lea.vmem %s4, 1968
  %s2079 = scalar_lea.vmem %s1, 1968
  %v2080 = vld [vmem:[%s2079] sm:$0xff]
  %2081 = vst [vmem:[%s2078] sm:$0xff] %v2080
  %s2082 = scalar_lea.vmem %s4, 1976
  %s2083 = scalar_lea.vmem %s1, 1976
  %v2084 = vld [vmem:[%s2083] sm:$0xff]
  %2085 = vst [vmem:[%s2082] sm:$0xff] %v2084
  %s2086 = scalar_lea.vmem %s4, 1984
  %s2087 = scalar_lea.vmem %s1, 1984
  %v2088 = vld [vmem:[%s2087] sm:$0xff]
  %2089 = vst [vmem:[%s2086] sm:$0xff] %v2088
  %s2090 = scalar_lea.vmem %s4, 1992
  %s2091 = scalar_lea.vmem %s1, 1992
  %v2092 = vld [vmem:[%s2091] sm:$0xff]
  %2093 = vst [vmem:[%s2090] sm:$0xff] %v2092
  %s2094 = scalar_lea.vmem %s4, 2000
  %s2095 = scalar_lea.vmem %s1, 2000
  %v2096 = vld [vmem:[%s2095] sm:$0xff]
  %2097 = vst [vmem:[%s2094] sm:$0xff] %v2096
  %s2098 = scalar_lea.vmem %s4, 2008
  %s2099 = scalar_lea.vmem %s1, 2008
  %v2100 = vld [vmem:[%s2099] sm:$0xff]
  %2101 = vst [vmem:[%s2098] sm:$0xff] %v2100
  %s2102 = scalar_lea.vmem %s4, 2016
  %s2103 = scalar_lea.vmem %s1, 2016
  %v2104 = vld [vmem:[%s2103] sm:$0xff]
  %2105 = vst [vmem:[%s2102] sm:$0xff] %v2104
  %s2106 = scalar_lea.vmem %s4, 2024
  %s2107 = scalar_lea.vmem %s1, 2024
  %v2108 = vld [vmem:[%s2107] sm:$0xff]
  %2109 = vst [vmem:[%s2106] sm:$0xff] %v2108
  %s2110 = scalar_lea.vmem %s4, 2032
  %s2111 = scalar_lea.vmem %s1, 2032
  %v2112 = vld [vmem:[%s2111] sm:$0xff]
  %2113 = vst [vmem:[%s2110] sm:$0xff] %v2112
  %s2114 = scalar_lea.vmem %s4, 2040
  %s2115 = scalar_lea.vmem %s1, 2040
  %v2116 = vld [vmem:[%s2115] sm:$0xff]
  %2117 = vst [vmem:[%s2114] sm:$0xff] %v2116
  %s2118 = scalar_lea.vmem %s4, 2048
  %s2119 = scalar_lea.vmem %s1, 2048
  %v2120 = vld [vmem:[%s2119] sm:$0xff]
  %2121 = vst [vmem:[%s2118] sm:$0xff] %v2120
  %s2122 = scalar_lea.vmem %s4, 2056
  %s2123 = scalar_lea.vmem %s1, 2056
  %v2124 = vld [vmem:[%s2123] sm:$0xff]
  %2125 = vst [vmem:[%s2122] sm:$0xff] %v2124
  %s2126 = scalar_lea.vmem %s4, 2064
  %s2127 = scalar_lea.vmem %s1, 2064
  %v2128 = vld [vmem:[%s2127] sm:$0xff]
  %2129 = vst [vmem:[%s2126] sm:$0xff] %v2128
  %s2130 = scalar_lea.vmem %s4, 2072
  %s2131 = scalar_lea.vmem %s1, 2072
  %v2132 = vld [vmem:[%s2131] sm:$0xff]
  %2133 = vst [vmem:[%s2130] sm:$0xff] %v2132
  %s2134 = scalar_lea.vmem %s4, 2080
  %s2135 = scalar_lea.vmem %s1, 2080
  %v2136 = vld [vmem:[%s2135] sm:$0xff]
  %2137 = vst [vmem:[%s2134] sm:$0xff] %v2136
  %s2138 = scalar_lea.vmem %s4, 2088
  %s2139 = scalar_lea.vmem %s1, 2088
  %v2140 = vld [vmem:[%s2139] sm:$0xff]
  %2141 = vst [vmem:[%s2138] sm:$0xff] %v2140
  %s2142 = scalar_lea.vmem %s4, 2096
  %s2143 = scalar_lea.vmem %s1, 2096
  %v2144 = vld [vmem:[%s2143] sm:$0xff]
  %2145 = vst [vmem:[%s2142] sm:$0xff] %v2144
  %s2146 = scalar_lea.vmem %s4, 2104
  %s2147 = scalar_lea.vmem %s1, 2104
  %v2148 = vld [vmem:[%s2147] sm:$0xff]
  %2149 = vst [vmem:[%s2146] sm:$0xff] %v2148
  %s2150 = scalar_lea.vmem %s4, 2112
  %s2151 = scalar_lea.vmem %s1, 2112
  %v2152 = vld [vmem:[%s2151] sm:$0xff]
  %2153 = vst [vmem:[%s2150] sm:$0xff] %v2152
  %s2154 = scalar_lea.vmem %s4, 2120
  %s2155 = scalar_lea.vmem %s1, 2120
  %v2156 = vld [vmem:[%s2155] sm:$0xff]
  %2157 = vst [vmem:[%s2154] sm:$0xff] %v2156
  %s2158 = scalar_lea.vmem %s4, 2128
  %s2159 = scalar_lea.vmem %s1, 2128
  %v2160 = vld [vmem:[%s2159] sm:$0xff]
  %2161 = vst [vmem:[%s2158] sm:$0xff] %v2160
  %s2162 = scalar_lea.vmem %s4, 2136
  %s2163 = scalar_lea.vmem %s1, 2136
  %v2164 = vld [vmem:[%s2163] sm:$0xff]
  %2165 = vst [vmem:[%s2162] sm:$0xff] %v2164
  %s2166 = scalar_lea.vmem %s4, 2144
  %s2167 = scalar_lea.vmem %s1, 2144
  %v2168 = vld [vmem:[%s2167] sm:$0xff]
  %2169 = vst [vmem:[%s2166] sm:$0xff] %v2168
  %s2170 = scalar_lea.vmem %s4, 2152
  %s2171 = scalar_lea.vmem %s1, 2152
  %v2172 = vld [vmem:[%s2171] sm:$0xff]
  %2173 = vst [vmem:[%s2170] sm:$0xff] %v2172
  %s2174 = scalar_lea.vmem %s4, 2160
  %s2175 = scalar_lea.vmem %s1, 2160
  %v2176 = vld [vmem:[%s2175] sm:$0xff]
  %2177 = vst [vmem:[%s2174] sm:$0xff] %v2176
  %s2178 = scalar_lea.vmem %s4, 2168
  %s2179 = scalar_lea.vmem %s1, 2168
  %v2180 = vld [vmem:[%s2179] sm:$0xff]
  %2181 = vst [vmem:[%s2178] sm:$0xff] %v2180
  %s2182 = scalar_lea.vmem %s1, 2176
  %v2183 = vld [vmem:[%s2182] sm:$0x3]
  %s2184 = scalar_lea.vmem %s4, 2176
  %vm2185 = vcmask 1041408
  %2186 = vst.msk [vmem:[%s2184] sm:$0xff] %vm2185, %v2183

</llo_original>
